<compile_context>
chip_gen: v7x
topology: tpu7x:2x2x1
jax: 0.10.0
libtpu: 0.0.40
codegen_flags: <defaults>
</compile_context>

<pallas_src>
import functools

import jax
import jax.numpy as jnp
from jax import lax
from jax.experimental import pallas as pl
from jax.experimental.pallas import tpu as pltpu

EPS = 1e-5


# ---------------------------------------------------------------------------
# Fused kernel: BN+ReLU -> zero-pad -> 3x3x3 conv (one K=27*Cin matmul with
# the 2x upsample folded into the weight N axis) -> + residual.
# ---------------------------------------------------------------------------
def _make_hourglass_kernel(hgt, wid, cin, cout, th, cdt):
    c3 = 3 * cin

    def kernel(x0_ref, x1_ref, x2_ref, w_ref, scale_ref, shift_ref, bias_ref,
               res_ref, o_ref, ap_ref):
        d = pl.program_id(1)
        ndep = pl.num_programs(1)
        t = pl.program_id(2)

        # Build the padded, BN+ReLU'd activation scratch once per (n, d) step.
        @pl.when(t == 0)
        def _build_activation():
            # Pack the 3 depth taps (d-1, d, d+1) on the channel/lane axis.
            xcat = jnp.concatenate(
                [x0_ref[...], x1_ref[...], x2_ref[...]], axis=-1
            ).astype(jnp.float32)                              # (H, W, 3*Cin)
            a = jnp.maximum(xcat * scale_ref[...] + shift_ref[...], 0.0)

            # Depth halo: tap d-1 invalid at d==0, tap d+1 invalid at d==D-1.
            ch = lax.broadcasted_iota(jnp.int32, (1, 1, c3), 2)
            valid = jnp.logical_and(
                jnp.logical_or(ch >= cin, d >= 1),
                jnp.logical_or(ch < 2 * cin, d < ndep - 1))
            a = jnp.where(valid, a, 0.0).astype(cdt)

            # Interior rows stored with their left/right zero columns attached;
            # only the top/bottom halo rows need an extra zero write.  No
            # full-scratch zeroing.
            zc = jnp.zeros((hgt, 1, c3), cdt)
            zr = jnp.zeros((1, wid + 2, c3), cdt)
            ap_ref[pl.ds(1, hgt), :, :] = jnp.concatenate([zc, a, zc], axis=1)
            ap_ref[pl.ds(0, 1), :, :] = zr
            ap_ref[pl.ds(hgt + 1, 1), :, :] = zr

        # im2col patch for this row tile: 9 (kh, kw) taps, each already holding
        # the 3 depth planes on lanes -> (th*W, 27*Cin).
        r0 = t * th
        cols = []
        for kh in range(3):
            for kw in range(3):
                sl = ap_ref[pl.ds(r0 + kh, th), pl.ds(kw, wid), :]
                cols.append(sl.reshape(th * wid, c3))
        patch = jnp.concatenate(cols, axis=-1)                 # (th*W, 27*Cin)

        # Single MXU matmul; N axis already holds the 8 upsample offsets, so
        # the result is lane-dense and ready for the residual add + store.
        conv = jnp.dot(patch, w_ref[...],
                       preferred_element_type=jnp.float32) + bias_ref[...]
        o_ref[...] = (res_ref[...].astype(jnp.float32) + conv).astype(o_ref.dtype)

    return kernel


# ---------------------------------------------------------------------------
# Public wrapper: PyTorch-style NCDHW in / NCDHW out.
# ---------------------------------------------------------------------------
def hourglass3d_up(x_ncdhw, res_ncdhw, params, *, compute_dtype=jnp.bfloat16,
                   out_dtype=None, row_tile=256):
    if out_dtype is None:
        out_dtype = jnp.float32

    gamma = params["gamma"].astype(jnp.float32)
    beta = params["beta"].astype(jnp.float32)
    rmean = params["running_mean"].astype(jnp.float32)
    rvar = params["running_var"].astype(jnp.float32)
    w_oidhw = params["conv_w"]                      # (Cout, Cin, 3, 3, 3)
    bias = params["conv_b"].astype(jnp.float32)     # (Cout,)

    n, cin, dep, hgt, wid = x_ncdhw.shape
    cout = w_oidhw.shape[0]
    hw = hgt * wid

    # Row tile (th rows of the pre-upsample H axis): keep th*W around
    # row_tile rows so live matmul intermediates stay near the vreg budget,
    # while satisfying the sublane constraint on the (th*W, 8*Cout) blocks.
    if hw <= row_tile:
        th = hgt
    else:
        th = max(1, row_tile // wid)
        while hgt % th:
            th -= 1
        while th < hgt and (th * wid) % 8:
            th += 1
            while hgt % th:
                th += 1
    n_tiles = hgt // th

    # ---- glue: NCDHW -> NDHWC, kept in compute dtype (halves input HBM) ----
    x = jnp.transpose(x_ncdhw, (0, 2, 3, 4, 1)).astype(compute_dtype)

    # ---- BN folded to per-channel scale/shift, tiled 3x (depth-tap pack) ---
    scale = gamma * lax.rsqrt(rvar + EPS)
    shift = beta - rmean * scale
    scale3 = jnp.tile(scale.reshape(1, cin), (1, 3))            # (1, 3*Cin)
    shift3 = jnp.tile(shift.reshape(1, cin), (1, 3))

    # ---- weight (Cout, Cin, 3,3,3) -> (27*Cin, 8*Cout) --------------------
    # K order (kh, kw, kd, cin) matches the in-kernel patch concat order;
    # the 8x tile on the N axis folds the nearest-2x upsample into the matmul.
    w_r = jnp.transpose(w_oidhw, (3, 4, 2, 1, 0)).reshape(27 * cin, cout)
    w_k = jnp.tile(w_r, (1, 8)).astype(compute_dtype)           # (27*Cin, 8*Cout)
    b_k = jnp.tile(bias.reshape(1, cout), (1, 8))               # (1, 8*Cout)

    # ---- residual NCDHW -> (N, D, H*W, 8*Cout): single big transpose -------
    res = res_ncdhw.astype(out_dtype).reshape(n, cout, dep, 2, hgt, 2, wid, 2)
    res = jnp.transpose(res, (0, 2, 4, 6, 3, 5, 7, 1))
    res_k = res.reshape(n, dep, hw, 8 * cout)

    kernel = _make_hourglass_kernel(hgt, wid, cin, cout, th, compute_dtype)

    def x_spec(kd):
        def imap(i, j, t):
            dz = jnp.maximum(jnp.minimum(j + (kd - 1), dep - 1), 0)
            return (i, dz, 0, 0, 0)
        return pl.BlockSpec((None, None, hgt, wid, cin), imap)

    out_k = pl.pallas_call(
        kernel,
        out_shape=jax.ShapeDtypeStruct((n, dep, hw, 8 * cout), out_dtype),
        grid=(n, dep, n_tiles),
        in_specs=[
            x_spec(0), x_spec(1), x_spec(2),
            pl.BlockSpec((27 * cin, 8 * cout), lambda i, j, t: (0, 0)),
            pl.BlockSpec((1, 3 * cin), lambda i, j, t: (0, 0)),
            pl.BlockSpec((1, 3 * cin), lambda i, j, t: (0, 0)),
            pl.BlockSpec((1, 8 * cout), lambda i, j, t: (0, 0)),
            pl.BlockSpec((None, None, th * wid, 8 * cout),
                         lambda i, j, t: (i, j, t, 0)),
        ],
        out_specs=pl.BlockSpec((None, None, th * wid, 8 * cout),
                               lambda i, j, t: (i, j, t, 0)),
        scratch_shapes=[pltpu.VMEM((hgt + 2, wid + 2, 3 * cin), compute_dtype)],
        input_output_aliases={7: 0},     # residual buffer reused as the output
        compiler_params=pltpu.CompilerParams(
            # The row-tile axis reuses the activation scratch across t, so it
            # must be "arbitrary"; N and D carry no cross-step state.
            dimension_semantics=("parallel", "parallel", "arbitrary")),
    )(x, x, x, w_k, scale3, shift3, b_k, res_k)

    # ---- glue: (N, D, H*W, 8*Cout) -> NCDHW: single big transpose ----------
    out = out_k.reshape(n, dep, hgt, wid, 2, 2, 2, cout)
    out = jnp.transpose(out, (0, 7, 1, 4, 2, 5, 3, 6))
    return out.reshape(n, cout, 2 * dep, 2 * hgt, 2 * wid)


# ---------------------------------------------------------------------------
# Pure-JAX reference (mirrors the PyTorch forward, eval-mode BN).
# ---------------------------------------------------------------------------
def reference(x, residual, params):
    scale = params["gamma"] / jnp.sqrt(params["running_var"] + EPS)
    shift = params["beta"] - params["running_mean"] * scale
    a = jnp.maximum(x * scale[None, :, None, None, None]
                    + shift[None, :, None, None, None], 0.0)
    y = lax.conv_general_dilated(
        a, params["conv_w"], window_strides=(1, 1, 1),
        padding=((1, 1), (1, 1), (1, 1)),
        dimension_numbers=("NCDHW", "OIDHW", "NCDHW"),
        precision=lax.Precision.HIGHEST)
    y = y + params["conv_b"][None, :, None, None, None]
    y = jnp.repeat(jnp.repeat(jnp.repeat(y, 2, axis=2), 2, axis=3), 2, axis=4)
    return y + residual


if __name__ == "__main__":
    N, CIN, COUT, D, H, W = 2, 4, 4, 4, 8, 8

    key = jax.random.PRNGKey(0)
    k1, k2, k3, k4 = jax.random.split(key, 4)
    x = jax.random.normal(k1, (N, CIN, D, H, W), jnp.float32)
    residual = jax.random.normal(k2, (N, COUT, 2 * D, 2 * H, 2 * W), jnp.float32)

    params = {
        "gamma": 1.0 + 0.1 * jnp.arange(CIN, dtype=jnp.float32),
        "beta": 0.05 * jnp.arange(CIN, dtype=jnp.float32),
        "running_mean": 0.02 * jnp.arange(CIN, dtype=jnp.float32),
        "running_var": 1.0 + 0.03 * jnp.arange(CIN, dtype=jnp.float32),
        "conv_w": 0.1 * jax.random.normal(k3, (COUT, CIN, 3, 3, 3), jnp.float32),
        "conv_b": 0.1 * jax.random.normal(k4, (COUT,), jnp.float32),
    }

    expected_shape = (N, COUT, 2 * D, 2 * H, 2 * W)
    ref = jax.block_until_ready(reference(x, residual, params))

    # Exact-precision path (f32 MXU matmul): must match the reference tightly.
    fwd_f32 = jax.jit(functools.partial(hourglass3d_up,
                                        compute_dtype=jnp.float32))
    out_f32 = jax.block_until_ready(fwd_f32(x, residual, params))
    if out_f32.shape != expected_shape:
        raise RuntimeError(f"bad output shape {out_f32.shape}")
    if not bool(jnp.allclose(out_f32, ref, atol=1e-4, rtol=1e-4)):
        max_err = float(jnp.max(jnp.abs(out_f32 - ref)))
        raise RuntimeError(f"f32 mismatch vs reference, max abs err = {max_err}")

    # Default fast path (bf16 input/weight stream, f32 accumulation).
    fwd = jax.jit(hourglass3d_up)
    out = jax.block_until_ready(fwd(x, residual, params))
    if out.shape != expected_shape:
        raise RuntimeError(f"bad output shape {out.shape}")
    if not bool(jnp.allclose(out, ref, atol=5e-2, rtol=5e-2)):
        max_err = float(jnp.max(jnp.abs(out - ref)))
        raise RuntimeError(f"bf16 mismatch vs reference, max abs err = {max_err}")

    print("KERNEL_OK")
</pallas_src>

<mosaic_0001>
module attributes {stable_mosaic.version = 11 : i64} {
  func.func @kernel(%arg0: i32, %arg1: i32, %arg2: i32, %arg3: memref<1x1x8x8x4xf32, #tpu.memory_space<vmem>>, %arg4: memref<1x1x8x8x4xf32, #tpu.memory_space<vmem>>, %arg5: memref<1x1x8x8x4xf32, #tpu.memory_space<vmem>>, %arg6: memref<108x32xf32, #tpu.memory_space<vmem>>, %arg7: memref<1x12xf32, #tpu.memory_space<vmem>>, %arg8: memref<1x12xf32, #tpu.memory_space<vmem>>, %arg9: memref<1x32xf32, #tpu.memory_space<vmem>>, %arg10: memref<1x1x64x32xf32, #tpu.memory_space<vmem>>, %arg11: memref<1x1x64x32xf32, #tpu.memory_space<vmem>>, %arg12: memref<10x10x12xf32, #tpu.memory_space<vmem>>) attributes {dimension_semantics = [#tpu.dimension_semantics<parallel>, #tpu.dimension_semantics<parallel>, #tpu.dimension_semantics<arbitrary>], iteration_bounds = array<i64: 2, 4, 1>, scalar_prefetch = 0 : i64, scratch_operands = 1 : i64, tpu.core_type = #tpu.core_type<tc>, window_params = [{transform_indices = @transform_0, window_bounds = array<i64: 1, 1, 8, 8, 4>}, {transform_indices = @transform_1, window_bounds = array<i64: 1, 1, 8, 8, 4>}, {transform_indices = @transform_2, window_bounds = array<i64: 1, 1, 8, 8, 4>}, {pipeline_mode = #tpu.pipeline_mode<synchronous>, transform_indices = @transform_3, window_bounds = array<i64: 108, 32>}, {pipeline_mode = #tpu.pipeline_mode<synchronous>, transform_indices = @transform_4, window_bounds = array<i64: 1, 12>}, {pipeline_mode = #tpu.pipeline_mode<synchronous>, transform_indices = @transform_5, window_bounds = array<i64: 1, 12>}, {pipeline_mode = #tpu.pipeline_mode<synchronous>, transform_indices = @transform_6, window_bounds = array<i64: 1, 32>}, {transform_indices = @transform_7, window_bounds = array<i64: 1, 1, 64, 32>}, {transform_indices = @transform_8, window_bounds = array<i64: 1, 1, 64, 32>}]} {
    %c0_i32 = arith.constant 0 : i32
    %0 = arith.cmpi eq, %arg2, %c0_i32 : i32
    %1 = arith.extui %0 : i1 to i32
    %c0_i32_0 = arith.constant 0 : i32
    %2 = arith.cmpi ne, %1, %c0_i32_0 : i32
    scf.if %2 {
      %c0_35 = arith.constant 0 : index
      %c0_36 = arith.constant 0 : index
      %c0_37 = arith.constant 0 : index
      %c0_38 = arith.constant 0 : index
      %c0_39 = arith.constant 0 : index
      %52 = vector.load %arg3[%c0_35, %c0_36, %c0_37, %c0_38, %c0_39] : memref<1x1x8x8x4xf32, #tpu.memory_space<vmem>>, vector<1x1x8x8x4xf32>
      %53 = vector.shape_cast %52 : vector<1x1x8x8x4xf32> to vector<8x8x4xf32>
      %c0_40 = arith.constant 0 : index
      %c0_41 = arith.constant 0 : index
      %c0_42 = arith.constant 0 : index
      %c0_43 = arith.constant 0 : index
      %c0_44 = arith.constant 0 : index
      %54 = vector.load %arg4[%c0_40, %c0_41, %c0_42, %c0_43, %c0_44] : memref<1x1x8x8x4xf32, #tpu.memory_space<vmem>>, vector<1x1x8x8x4xf32>
      %55 = vector.shape_cast %54 : vector<1x1x8x8x4xf32> to vector<8x8x4xf32>
      %c0_45 = arith.constant 0 : index
      %c0_46 = arith.constant 0 : index
      %c0_47 = arith.constant 0 : index
      %c0_48 = arith.constant 0 : index
      %c0_49 = arith.constant 0 : index
      %56 = vector.load %arg5[%c0_45, %c0_46, %c0_47, %c0_48, %c0_49] : memref<1x1x8x8x4xf32, #tpu.memory_space<vmem>>, vector<1x1x8x8x4xf32>
      %57 = vector.shape_cast %56 : vector<1x1x8x8x4xf32> to vector<8x8x4xf32>
      %58 = tpu.concatenate %53, %55, %57 in 2 : vector<8x8x4xf32>, vector<8x8x4xf32>, vector<8x8x4xf32> -> vector<8x8x12xf32>
      %c0_50 = arith.constant 0 : index
      %c0_51 = arith.constant 0 : index
      %59 = vector.load %arg7[%c0_50, %c0_51] : memref<1x12xf32, #tpu.memory_space<vmem>>, vector<1x12xf32>
      %60 = vector.shape_cast %59 : vector<1x12xf32> to vector<1x1x12xf32>
      %61 = vector.broadcast %60 : vector<1x1x12xf32> to vector<8x8x12xf32>
      %62 = arith.mulf %58, %61 : vector<8x8x12xf32>
      %c0_52 = arith.constant 0 : index
      %c0_53 = arith.constant 0 : index
      %63 = vector.load %arg8[%c0_52, %c0_53] : memref<1x12xf32, #tpu.memory_space<vmem>>, vector<1x12xf32>
      %64 = vector.shape_cast %63 : vector<1x12xf32> to vector<1x1x12xf32>
      %65 = vector.broadcast %64 : vector<1x1x12xf32> to vector<8x8x12xf32>
      %66 = arith.addf %62, %65 : vector<8x8x12xf32>
      %cst_54 = arith.constant 0.000000e+00 : f32
      %67 = vector.broadcast %cst_54 : f32 to vector<8x8x12xf32>
      %68 = arith.maximumf %66, %67 : vector<8x8x12xf32>
      %69 = tpu.iota {dimensions = array<i32: 2>} : vector<1x1x12xi32>
      %c4_i32 = arith.constant 4 : i32
      %70 = vector.broadcast %c4_i32 : i32 to vector<1x1x12xi32>
      %71 = arith.cmpi sge, %69, %70 : vector<1x1x12xi32>
      %c1_i32_55 = arith.constant 1 : i32
      %72 = arith.cmpi sge, %arg1, %c1_i32_55 : i32
      %73 = vector.broadcast %72 : i1 to vector<1x1x12xi1>
      %74 = arith.ori %71, %73 : vector<1x1x12xi1>
      %c8_i32_56 = arith.constant 8 : i32
      %75 = vector.broadcast %c8_i32_56 : i32 to vector<1x1x12xi32>
      %76 = arith.cmpi slt, %69, %75 : vector<1x1x12xi32>
      %c3_i32 = arith.constant 3 : i32
      %77 = arith.cmpi slt, %arg1, %c3_i32 : i32
      %78 = vector.broadcast %77 : i1 to vector<1x1x12xi1>
      %79 = arith.ori %76, %78 : vector<1x1x12xi1>
      %80 = arith.andi %74, %79 : vector<1x1x12xi1>
      %cst_57 = arith.constant 0.000000e+00 : f32
      %81 = vector.shape_cast %80 : vector<1x1x12xi1> to vector<1x1x12xi1>
      %82 = vector.broadcast %81 : vector<1x1x12xi1> to vector<8x8x12xi1>
      %83 = vector.broadcast %cst_57 : f32 to vector<8x8x12xf32>
      %84 = arith.select %82, %68, %83 : vector<8x8x12xi1>, vector<8x8x12xf32>
      %cst_58 = arith.constant 0.000000e+00 : f32
      %85 = vector.broadcast %cst_58 : f32 to vector<8x1x12xf32>
      %cst_59 = arith.constant 0.000000e+00 : f32
      %86 = vector.broadcast %cst_59 : f32 to vector<1x10x12xf32>
      %87 = tpu.concatenate %85, %84, %85 in 1 : vector<8x1x12xf32>, vector<8x8x12xf32>, vector<8x1x12xf32> -> vector<8x10x12xf32>
      %c1_60 = arith.constant 1 : index
      %c0_61 = arith.constant 0 : index
      %c0_62 = arith.constant 0 : index
      %88 = vector.load %arg12[%c1_60, %c0_61, %c0_62] : memref<10x10x12xf32, #tpu.memory_space<vmem>>, vector<8x10x12xf32>
      tpu.vector_store %arg12[%c1_60, %c0_61, %c0_62], %87 {strides = array<i32>} : memref<10x10x12xf32, #tpu.memory_space<vmem>>, vector<8x10x12xf32>,
      %c0_63 = arith.constant 0 : index
      %c0_64 = arith.constant 0 : index
      %c0_65 = arith.constant 0 : index
      %89 = vector.load %arg12[%c0_63, %c0_64, %c0_65] : memref<10x10x12xf32, #tpu.memory_space<vmem>>, vector<1x10x12xf32>
      tpu.vector_store %arg12[%c0_63, %c0_64, %c0_65], %86 {strides = array<i32>} : memref<10x10x12xf32, #tpu.memory_space<vmem>>, vector<1x10x12xf32>,
      %c9 = arith.constant 9 : index
      %c0_66 = arith.constant 0 : index
      %c0_67 = arith.constant 0 : index
      %90 = vector.load %arg12[%c9, %c0_66, %c0_67] : memref<10x10x12xf32, #tpu.memory_space<vmem>>, vector<1x10x12xf32>
      tpu.vector_store %arg12[%c9, %c0_66, %c0_67], %86 {strides = array<i32>} : memref<10x10x12xf32, #tpu.memory_space<vmem>>, vector<1x10x12xf32>,
    } else {
    }
    %c8_i32 = arith.constant 8 : i32
    %3 = arith.muli %arg2, %c8_i32 : i32
    %c0_i32_1 = arith.constant 0 : i32
    %4 = arith.addi %3, %c0_i32_1 : i32
    %5 = arith.index_cast %4 : i32 to index
    %c0 = arith.constant 0 : index
    %c0_2 = arith.constant 0 : index
    %6 = vector.load %arg12[%5, %c0, %c0_2] : memref<10x10x12xf32, #tpu.memory_space<vmem>>, vector<8x8x12xf32>
    %7 = vector.shape_cast %6 : vector<8x8x12xf32> to vector<64x12xf32>
    %c0_i32_3 = arith.constant 0 : i32
    %8 = arith.addi %3, %c0_i32_3 : i32
    %9 = arith.index_cast %8 : i32 to index
    %c1 = arith.constant 1 : index
    %c0_4 = arith.constant 0 : index
    %10 = vector.load %arg12[%9, %c1, %c0_4] : memref<10x10x12xf32, #tpu.memory_space<vmem>>, vector<8x8x12xf32>
    %11 = vector.shape_cast %10 : vector<8x8x12xf32> to vector<64x12xf32>
    %c0_i32_5 = arith.constant 0 : i32
    %12 = arith.addi %3, %c0_i32_5 : i32
    %13 = arith.index_cast %12 : i32 to index
    %c2 = arith.constant 2 : index
    %c0_6 = arith.constant 0 : index
    %14 = vector.load %arg12[%13, %c2, %c0_6] : memref<10x10x12xf32, #tpu.memory_space<vmem>>, vector<8x8x12xf32>
    %15 = vector.shape_cast %14 : vector<8x8x12xf32> to vector<64x12xf32>
    %c1_i32 = arith.constant 1 : i32
    %16 = arith.addi %3, %c1_i32 : i32
    %17 = arith.index_cast %16 : i32 to index
    %c0_7 = arith.constant 0 : index
    %c0_8 = arith.constant 0 : index
    %18 = vector.load %arg12[%17, %c0_7, %c0_8] : memref<10x10x12xf32, #tpu.memory_space<vmem>>, vector<8x8x12xf32>
    %19 = vector.shape_cast %18 : vector<8x8x12xf32> to vector<64x12xf32>
    %c1_i32_9 = arith.constant 1 : i32
    %20 = arith.addi %3, %c1_i32_9 : i32
    %21 = arith.index_cast %20 : i32 to index
    %c1_10 = arith.constant 1 : index
    %c0_11 = arith.constant 0 : index
    %22 = vector.load %arg12[%21, %c1_10, %c0_11] : memref<10x10x12xf32, #tpu.memory_space<vmem>>, vector<8x8x12xf32>
    %23 = vector.shape_cast %22 : vector<8x8x12xf32> to vector<64x12xf32>
    %c1_i32_12 = arith.constant 1 : i32
    %24 = arith.addi %3, %c1_i32_12 : i32
    %25 = arith.index_cast %24 : i32 to index
    %c2_13 = arith.constant 2 : index
    %c0_14 = arith.constant 0 : index
    %26 = vector.load %arg12[%25, %c2_13, %c0_14] : memref<10x10x12xf32, #tpu.memory_space<vmem>>, vector<8x8x12xf32>
    %27 = vector.shape_cast %26 : vector<8x8x12xf32> to vector<64x12xf32>
    %c2_i32 = arith.constant 2 : i32
    %28 = arith.addi %3, %c2_i32 : i32
    %29 = arith.index_cast %28 : i32 to index
    %c0_15 = arith.constant 0 : index
    %c0_16 = arith.constant 0 : index
    %30 = vector.load %arg12[%29, %c0_15, %c0_16] : memref<10x10x12xf32, #tpu.memory_space<vmem>>, vector<8x8x12xf32>
    %31 = vector.shape_cast %30 : vector<8x8x12xf32> to vector<64x12xf32>
    %c2_i32_17 = arith.constant 2 : i32
    %32 = arith.addi %3, %c2_i32_17 : i32
    %33 = arith.index_cast %32 : i32 to index
    %c1_18 = arith.constant 1 : index
    %c0_19 = arith.constant 0 : index
    %34 = vector.load %arg12[%33, %c1_18, %c0_19] : memref<10x10x12xf32, #tpu.memory_space<vmem>>, vector<8x8x12xf32>
    %35 = vector.shape_cast %34 : vector<8x8x12xf32> to vector<64x12xf32>
    %c2_i32_20 = arith.constant 2 : i32
    %36 = arith.addi %3, %c2_i32_20 : i32
    %37 = arith.index_cast %36 : i32 to index
    %c2_21 = arith.constant 2 : index
    %c0_22 = arith.constant 0 : index
    %38 = vector.load %arg12[%37, %c2_21, %c0_22] : memref<10x10x12xf32, #tpu.memory_space<vmem>>, vector<8x8x12xf32>
    %39 = vector.shape_cast %38 : vector<8x8x12xf32> to vector<64x12xf32>
    %40 = tpu.concatenate %7, %11, %15, %19, %23, %27, %31, %35, %39 in 1 : vector<64x12xf32>, vector<64x12xf32>, vector<64x12xf32>, vector<64x12xf32>, vector<64x12xf32>, vector<64x12xf32>, vector<64x12xf32>, vector<64x12xf32>, vector<64x12xf32> -> vector<64x108xf32>
    %c0_23 = arith.constant 0 : index
    %c0_24 = arith.constant 0 : index
    %41 = vector.load %arg6[%c0_23, %c0_24] : memref<108x32xf32, #tpu.memory_space<vmem>>, vector<108x32xf32>
    %cst = arith.constant dense<0.000000e+00> : vector<64x32xf32>
    %42 = tpu.matmul %40, %41, %cst {dimension_numbers = #tpu.dot_dimension_numbers<[1], [0], [0], [1], [0, 0, 1, 1], [], []>} : vector<64x108xf32>, vector<108x32xf32>, vector<64x32xf32> -> vector<64x32xf32>
    %c0_25 = arith.constant 0 : index
    %c0_26 = arith.constant 0 : index
    %43 = vector.load %arg9[%c0_25, %c0_26] : memref<1x32xf32, #tpu.memory_space<vmem>>, vector<1x32xf32>
    %44 = vector.broadcast %43 : vector<1x32xf32> to vector<64x32xf32>
    %45 = arith.addf %42, %44 : vector<64x32xf32>
    %c0_27 = arith.constant 0 : index
    %c0_28 = arith.constant 0 : index
    %c0_29 = arith.constant 0 : index
    %c0_30 = arith.constant 0 : index
    %46 = vector.load %arg10[%c0_27, %c0_28, %c0_29, %c0_30] : memref<1x1x64x32xf32, #tpu.memory_space<vmem>>, vector<1x1x64x32xf32>
    %47 = vector.shape_cast %46 : vector<1x1x64x32xf32> to vector<64x32xf32>
    %48 = arith.addf %47, %45 : vector<64x32xf32>
    %c0_31 = arith.constant 0 : index
    %c0_32 = arith.constant 0 : index
    %c0_33 = arith.constant 0 : index
    %c0_34 = arith.constant 0 : index
    %49 = vector.load %arg11[%c0_31, %c0_32, %c0_33, %c0_34] : memref<1x1x64x32xf32, #tpu.memory_space<vmem>>, vector<1x1x64x32xf32>
    %50 = vector.shape_cast %49 : vector<1x1x64x32xf32> to vector<64x32xf32>
    %51 = vector.shape_cast %48 : vector<64x32xf32> to vector<1x1x64x32xf32>
    tpu.vector_store %arg11[%c0_31, %c0_32, %c0_33, %c0_34], %51 {strides = array<i32>} : memref<1x1x64x32xf32, #tpu.memory_space<vmem>>, vector<1x1x64x32xf32>,
    return
  }
  func.func @transform_0(%arg0: i32, %arg1: i32, %arg2: i32) -> (i32, i32, i32, i32, i32) {
    %c-1_i32 = arith.constant -1 : i32
    %0 = arith.addi %arg1, %c-1_i32 : i32
    %c3_i32 = arith.constant 3 : i32
    %1 = arith.minsi %0, %c3_i32 : i32
    %c0_i32 = arith.constant 0 : i32
    %2 = arith.maxsi %1, %c0_i32 : i32
    %c0_i32_0 = arith.constant 0 : i32
    %c0_i32_1 = arith.constant 0 : i32
    %c0_i32_2 = arith.constant 0 : i32
    %c0_i32_3 = arith.constant 0 : i32
    return %arg0, %2, %c0_i32_0, %c0_i32_1, %c0_i32_2 : i32, i32, i32, i32, i32
  }
  func.func @transform_1(%arg0: i32, %arg1: i32, %arg2: i32) -> (i32, i32, i32, i32, i32) {
    %c0_i32 = arith.constant 0 : i32
    %0 = arith.addi %arg1, %c0_i32 : i32
    %c3_i32 = arith.constant 3 : i32
    %1 = arith.minsi %0, %c3_i32 : i32
    %c0_i32_0 = arith.constant 0 : i32
    %2 = arith.maxsi %1, %c0_i32_0 : i32
    %c0_i32_1 = arith.constant 0 : i32
    %c0_i32_2 = arith.constant 0 : i32
    %c0_i32_3 = arith.constant 0 : i32
    %c0_i32_4 = arith.constant 0 : i32
    return %arg0, %2, %c0_i32_1, %c0_i32_2, %c0_i32_3 : i32, i32, i32, i32, i32
  }
  func.func @transform_2(%arg0: i32, %arg1: i32, %arg2: i32) -> (i32, i32, i32, i32, i32) {
    %c1_i32 = arith.constant 1 : i32
    %0 = arith.addi %arg1, %c1_i32 : i32
    %c3_i32 = arith.constant 3 : i32
    %1 = arith.minsi %0, %c3_i32 : i32
    %c0_i32 = arith.constant 0 : i32
    %2 = arith.maxsi %1, %c0_i32 : i32
    %c0_i32_0 = arith.constant 0 : i32
    %c0_i32_1 = arith.constant 0 : i32
    %c0_i32_2 = arith.constant 0 : i32
    %c0_i32_3 = arith.constant 0 : i32
    return %arg0, %2, %c0_i32_0, %c0_i32_1, %c0_i32_2 : i32, i32, i32, i32, i32
  }
  func.func @transform_3(%arg0: i32, %arg1: i32, %arg2: i32) -> (i32, i32) {
    %c0_i32 = arith.constant 0 : i32
    %c0_i32_0 = arith.constant 0 : i32
    %c0_i32_1 = arith.constant 0 : i32
    return %c0_i32, %c0_i32_0 : i32, i32
  }
  func.func @transform_4(%arg0: i32, %arg1: i32, %arg2: i32) -> (i32, i32) {
    %c0_i32 = arith.constant 0 : i32
    %c0_i32_0 = arith.constant 0 : i32
    %c0_i32_1 = arith.constant 0 : i32
    return %c0_i32, %c0_i32_0 : i32, i32
  }
  func.func @transform_5(%arg0: i32, %arg1: i32, %arg2: i32) -> (i32, i32) {
    %c0_i32 = arith.constant 0 : i32
    %c0_i32_0 = arith.constant 0 : i32
    %c0_i32_1 = arith.constant 0 : i32
    return %c0_i32, %c0_i32_0 : i32, i32
  }
  func.func @transform_6(%arg0: i32, %arg1: i32, %arg2: i32) -> (i32, i32) {
    %c0_i32 = arith.constant 0 : i32
    %c0_i32_0 = arith.constant 0 : i32
    %c0_i32_1 = arith.constant 0 : i32
    return %c0_i32, %c0_i32_0 : i32, i32
  }
  func.func @transform_7(%arg0: i32, %arg1: i32, %arg2: i32) -> (i32, i32, i32, i32) {
    %c0_i32 = arith.constant 0 : i32
    %c0_i32_0 = arith.constant 0 : i32
    return %arg0, %arg1, %arg2, %c0_i32 : i32, i32, i32, i32
  }
  func.func @transform_8(%arg0: i32, %arg1: i32, %arg2: i32) -> (i32, i32, i32, i32) {
    %c0_i32 = arith.constant 0 : i32
    %c0_i32_0 = arith.constant 0 : i32
    return %arg0, %arg1, %arg2, %c0_i32 : i32, i32, i32, i32
  }
}

</mosaic_0001>

<llo_original>
// kernel: hourglass3d_up.1
$region0: #{hourglass3d_up.1}
  #allocation0 [shape = 'u32[]', space=smem, size = 0x4, offset = 0x4, fixed_abs, tag = 'smem constant byte address 0x4 - core index']
  #allocation1 [shape = 'u32[144,128]{1,0:T(1,128)}', space=vmem, size = 0x12000, scoped, tag = 'internal scratch']
  #allocation2 [shape = 'f32[10,10,12]{2,1,0:T(8,128)}', space=vmem, size = 0x14000, scoped, tag = 'scratch operand']
  %s0 = inlined_call_operand.vmem [shape: f32[2,4,8,8,4], index: 0, kind: input, shape index: {}, may-alias: {0,1,2}]
  %s1 = inlined_call_operand.vmem [shape: f32[2,4,8,8,4], index: 1, kind: input, shape index: {}, may-alias: {0,1,2}]
  %s2 = inlined_call_operand.vmem [shape: f32[2,4,8,8,4], index: 2, kind: input, shape index: {}, may-alias: {0,1,2}]
  %s3 = inlined_call_operand.vmem [shape: f32[108,32], index: 3, kind: input, shape index: {}]
  %s4 = inlined_call_operand.vmem [shape: f32[1,12], index: 4, kind: input, shape index: {}]
  %s5 = inlined_call_operand.vmem [shape: f32[1,12], index: 5, kind: input, shape index: {}]
  %s6 = inlined_call_operand.vmem [shape: f32[1,32], index: 6, kind: input, shape index: {}]
  %s7 = inlined_call_operand.vmem [shape: f32[2,4,64,32], index: 7, kind: input, shape index: {}, may-alias: {7,8}]
  %s8 = inlined_call_operand.vmem [shape: f32[2,4,64,32], index: 8, kind: output, shape index: {}, may-alias: {7,8}]
  %s9 = sld [smem:[#allocation0]]
  $region69: #{hourglass3d_up.1} parent=0
    _
  %s11 = ssub.s32 1, %s9
  %s12 = scalar_select 0, %s11, %s9
  loop: start=0, step=1, limit=10
  $region2: #{hourglass3d_up.1} parent=0 // loop_pre_header
    _
  $region3: #{hourglass3d_up.1} parent=0 // loop_header
    %s14 = sphi 0, %s18
    %p15 = scmp.ge.s32.totalorder %s14, 10
    %s21 = sphi 0, %s40
    %s22 = sphi 0, %s36
    %s23 = sphi 0, %s32
    %s24 = sphi 0, %s21
    %s25 = sphi 0, %s22
    %s26 = sphi 0, %s23
    %s27 = sphi 0, %s24
    %s28 = sphi 0, %s25
    %s29 = sphi 0, %s26
    %s55 = sphi 0, %s57
    %s58 = sphi 0, %s55
    %s59 = sphi 0, %s58
    %s75 = sphi 0, %s59
    %s91 = sphi 0, %s93
    %s94 = sphi 0, %s91
    %s95 = sphi 0, %s94
    %s111 = sphi 0, %s95
    %s129 = sphi 0, %s131
    %s132 = sphi 0, %s129
    %s133 = sphi 0, %s132
    %s149 = sphi 0, %s133
    %s153 = sphi 0, %s153
    %s155 = sphi 0, %s153
    %s156 = sphi 0, %s155
    %s170 = sphi 0, %s156
    %s174 = sphi 0, %s174
    %s176 = sphi 0, %s174
    %s177 = sphi 0, %s176
    %s191 = sphi 0, %s177
    %s195 = sphi 0, %s195
    %s197 = sphi 0, %s195
    %s198 = sphi 0, %s197
    %s212 = sphi 0, %s198
    %s216 = sphi 0, %s216
    %s218 = sphi 0, %s216
    %s219 = sphi 0, %s218
    %s233 = sphi 0, %s219
    %s243 = sphi 0, %s245
    %s246 = sphi 0, %s243
    %s247 = sphi 0, %s246
    %s263 = sphi 0, %s247
    %s273 = sphi 0, %s275
    %s276 = sphi 0, %s273
    %s277 = sphi 0, %s276
    %s293 = sphi 0, %s277
  $region4: #{hourglass3d_up.1} parent=0 // loop_header_branch
    %17 = sbr.rel (%p15) target = $region8
  $region5: #{hourglass3d_up.1} parent=0 // loop_body
    %s19 = ssub.s32 %s14, 1
    %s20 = ssub.s32 %s14, 2
    %s30 = sadd.s32 1, %s23
    %p31 = scmp.ge.s32.totalorder %s30, 1
    %s32 = scalar_select %p31, 0, %s30
    %s33 = sadd.s32 1, %s22
    %s34 = scalar_select %p31, %s33, %s22
    %p35 = scmp.ge.s32.totalorder %s34, 4
    %s36 = scalar_select %p35, 0, %s34
    %s37 = sadd.s32 1, %s21
    %s38 = scalar_select %p35, %s37, %s21
    %p39 = scmp.ge.s32.totalorder %s38, 2
    %s40 = scalar_select %p39, 0, %s38
    %s41 = sadd.s32 %s22, 4294967295
    %p42 = scmp.lt.s32.totalorder %s41, 3
    %s43 = scalar_select %p42, %s41, 3
    %p44 = scmp.gt.s32.totalorder %s43, 0
    %s45 = scalar_select %p44, %s43, 0
    %s46 = sadd.s32 %s36, 4294967295
    %p47 = scmp.lt.s32.totalorder %s46, 3
    %s48 = scalar_select %p47, %s46, 3
    %p49 = scmp.gt.s32.totalorder %s48, 0
    %s50 = scalar_select %p49, %s48, 0
    %s51 = ssub.s32 %s21, %s40
    %s52 = ssub.s32 %s45, %s50
    %s53 = sor.u32 %s51, %s52
    %p54 = scmp.eq.s32.totalorder %s53, 0
    %s56 = sadd.s32 %s55, 1
    %s57 = scalar_select %p54, %s55, %s56
    %p60 = pneg %p54
    %p61 = scmp.eq.s32.totalorder %s14, 7
    %p62 = por %p60, %p61
    %p63 = scmp.ne.s32.totalorder %s55, %s58
    %p64 = scmp.eq.s32.totalorder %s14, 0
    %p65 = por %p63, %p64
    %p66 = scmp.ne.s32.totalorder %s55, %s58
    %p67 = scmp.eq.s32.totalorder %s19, 7
    %p68 = por %p66, %p67
    %p69 = scmp.ne.s32.totalorder %s58, %s59
    %p70 = scmp.eq.s32.totalorder %s19, 0
    %p71 = por %p69, %p70
    %p72 = scmp.ne.s32.totalorder %s58, %s59
    %p73 = scmp.eq.s32.totalorder %s20, 7
    %p74 = por %p72, %p73
    %p76 = scmp.ne.s32.totalorder %s59, %s75
    %p77 = scmp.eq.s32.totalorder %s20, 0
    %p78 = por %p76, %p77
    %p79 = scmp.lt.s32.totalorder %s22, 3
    %s80 = scalar_select %p79, %s22, 3
    %p81 = scmp.gt.s32.totalorder %s80, 0
    %s82 = scalar_select %p81, %s80, 0
    %p83 = scmp.lt.s32.totalorder %s36, 3
    %s84 = scalar_select %p83, %s36, 3
    %p85 = scmp.gt.s32.totalorder %s84, 0
    %s86 = scalar_select %p85, %s84, 0
    %s87 = ssub.s32 %s21, %s40
    %s88 = ssub.s32 %s82, %s86
    %s89 = sor.u32 %s87, %s88
    %p90 = scmp.eq.s32.totalorder %s89, 0
    %s92 = sadd.s32 %s91, 1
    %s93 = scalar_select %p90, %s91, %s92
    %p96 = pneg %p90
    %p97 = scmp.eq.s32.totalorder %s14, 7
    %p98 = por %p96, %p97
    %p99 = scmp.ne.s32.totalorder %s91, %s94
    %p100 = scmp.eq.s32.totalorder %s14, 0
    %p101 = por %p99, %p100
    %p102 = scmp.ne.s32.totalorder %s91, %s94
    %p103 = scmp.eq.s32.totalorder %s19, 7
    %p104 = por %p102, %p103
    %p105 = scmp.ne.s32.totalorder %s94, %s95
    %p106 = scmp.eq.s32.totalorder %s19, 0
    %p107 = por %p105, %p106
    %p108 = scmp.ne.s32.totalorder %s94, %s95
    %p109 = scmp.eq.s32.totalorder %s20, 7
    %p110 = por %p108, %p109
    %p112 = scmp.ne.s32.totalorder %s95, %s111
    %p113 = scmp.eq.s32.totalorder %s20, 0
    %p114 = por %p112, %p113
    %s115 = sadd.s32 %s22, 1
    %p116 = scmp.lt.s32.totalorder %s115, 3
    %s117 = scalar_select %p116, %s115, 3
    %p118 = scmp.gt.s32.totalorder %s117, 0
    %s119 = scalar_select %p118, %s117, 0
    %s120 = sadd.s32 %s36, 1
    %p121 = scmp.lt.s32.totalorder %s120, 3
    %s122 = scalar_select %p121, %s120, 3
    %p123 = scmp.gt.s32.totalorder %s122, 0
    %s124 = scalar_select %p123, %s122, 0
    %s125 = ssub.s32 %s21, %s40
    %s126 = ssub.s32 %s119, %s124
    %s127 = sor.u32 %s125, %s126
    %p128 = scmp.eq.s32.totalorder %s127, 0
    %s130 = sadd.s32 %s129, 1
    %s131 = scalar_select %p128, %s129, %s130
    %p134 = pneg %p128
    %p135 = scmp.eq.s32.totalorder %s14, 7
    %p136 = por %p134, %p135
    %p137 = scmp.ne.s32.totalorder %s129, %s132
    %p138 = scmp.eq.s32.totalorder %s14, 0
    %p139 = por %p137, %p138
    %p140 = scmp.ne.s32.totalorder %s129, %s132
    %p141 = scmp.eq.s32.totalorder %s19, 7
    %p142 = por %p140, %p141
    %p143 = scmp.ne.s32.totalorder %s132, %s133
    %p144 = scmp.eq.s32.totalorder %s19, 0
    %p145 = por %p143, %p144
    %p146 = scmp.ne.s32.totalorder %s132, %s133
    %p147 = scmp.eq.s32.totalorder %s20, 7
    %p148 = por %p146, %p147
    %p150 = scmp.ne.s32.totalorder %s133, %s149
    %p151 = scmp.eq.s32.totalorder %s20, 0
    %p152 = por %p150, %p151
    %s154 = sadd.s32 %s153, 1
    %p157 = scmp.eq.s32.totalorder %s14, 7
    %p158 = scmp.ne.s32.totalorder %s153, %s155
    %p159 = scmp.eq.s32.totalorder %s14, 0
    %p160 = por %p158, %p159
    %p161 = scmp.ne.s32.totalorder %s153, %s155
    %p162 = scmp.eq.s32.totalorder %s19, 7
    %p163 = por %p161, %p162
    %p164 = scmp.ne.s32.totalorder %s155, %s156
    %p165 = scmp.eq.s32.totalorder %s19, 0
    %p166 = por %p164, %p165
    %p167 = scmp.ne.s32.totalorder %s155, %s156
    %p168 = scmp.eq.s32.totalorder %s20, 7
    %p169 = por %p167, %p168
    %p171 = scmp.ne.s32.totalorder %s156, %s170
    %p172 = scmp.eq.s32.totalorder %s20, 0
    %p173 = por %p171, %p172
    %s175 = sadd.s32 %s174, 1
    %p178 = scmp.eq.s32.totalorder %s14, 7
    %p179 = scmp.ne.s32.totalorder %s174, %s176
    %p180 = scmp.eq.s32.totalorder %s14, 0
    %p181 = por %p179, %p180
    %p182 = scmp.ne.s32.totalorder %s174, %s176
    %p183 = scmp.eq.s32.totalorder %s19, 7
    %p184 = por %p182, %p183
    %p185 = scmp.ne.s32.totalorder %s176, %s177
    %p186 = scmp.eq.s32.totalorder %s19, 0
    %p187 = por %p185, %p186
    %p188 = scmp.ne.s32.totalorder %s176, %s177
    %p189 = scmp.eq.s32.totalorder %s20, 7
    %p190 = por %p188, %p189
    %p192 = scmp.ne.s32.totalorder %s177, %s191
    %p193 = scmp.eq.s32.totalorder %s20, 0
    %p194 = por %p192, %p193
    %s196 = sadd.s32 %s195, 1
    %p199 = scmp.eq.s32.totalorder %s14, 7
    %p200 = scmp.ne.s32.totalorder %s195, %s197
    %p201 = scmp.eq.s32.totalorder %s14, 0
    %p202 = por %p200, %p201
    %p203 = scmp.ne.s32.totalorder %s195, %s197
    %p204 = scmp.eq.s32.totalorder %s19, 7
    %p205 = por %p203, %p204
    %p206 = scmp.ne.s32.totalorder %s197, %s198
    %p207 = scmp.eq.s32.totalorder %s19, 0
    %p208 = por %p206, %p207
    %p209 = scmp.ne.s32.totalorder %s197, %s198
    %p210 = scmp.eq.s32.totalorder %s20, 7
    %p211 = por %p209, %p210
    %p213 = scmp.ne.s32.totalorder %s198, %s212
    %p214 = scmp.eq.s32.totalorder %s20, 0
    %p215 = por %p213, %p214
    %s217 = sadd.s32 %s216, 1
    %p220 = scmp.eq.s32.totalorder %s14, 7
    %p221 = scmp.ne.s32.totalorder %s216, %s218
    %p222 = scmp.eq.s32.totalorder %s14, 0
    %p223 = por %p221, %p222
    %p224 = scmp.ne.s32.totalorder %s216, %s218
    %p225 = scmp.eq.s32.totalorder %s19, 7
    %p226 = por %p224, %p225
    %p227 = scmp.ne.s32.totalorder %s218, %s219
    %p228 = scmp.eq.s32.totalorder %s19, 0
    %p229 = por %p227, %p228
    %p230 = scmp.ne.s32.totalorder %s218, %s219
    %p231 = scmp.eq.s32.totalorder %s20, 7
    %p232 = por %p230, %p231
    %p234 = scmp.ne.s32.totalorder %s219, %s233
    %p235 = scmp.eq.s32.totalorder %s20, 0
    %p236 = por %p234, %p235
    %s237 = ssub.s32 %s21, %s40
    %s238 = ssub.s32 %s22, %s36
    %s239 = sor.u32 %s237, %s238
    %s240 = ssub.s32 %s23, %s32
    %s241 = sor.u32 %s239, %s240
    %p242 = scmp.eq.s32.totalorder %s241, 0
    %s244 = sadd.s32 %s243, 1
    %s245 = scalar_select %p242, %s243, %s244
    %p248 = pneg %p242
    %p249 = scmp.eq.s32.totalorder %s14, 7
    %p250 = por %p248, %p249
    %p251 = scmp.ne.s32.totalorder %s243, %s246
    %p252 = scmp.eq.s32.totalorder %s14, 0
    %p253 = por %p251, %p252
    %p254 = scmp.ne.s32.totalorder %s243, %s246
    %p255 = scmp.eq.s32.totalorder %s19, 7
    %p256 = por %p254, %p255
    %p257 = scmp.ne.s32.totalorder %s246, %s247
    %p258 = scmp.eq.s32.totalorder %s19, 0
    %p259 = por %p257, %p258
    %p260 = scmp.ne.s32.totalorder %s246, %s247
    %p261 = scmp.eq.s32.totalorder %s20, 7
    %p262 = por %p260, %p261
    %p264 = scmp.ne.s32.totalorder %s247, %s263
    %p265 = scmp.eq.s32.totalorder %s20, 0
    %p266 = por %p264, %p265
    %s267 = ssub.s32 %s21, %s40
    %s268 = ssub.s32 %s22, %s36
    %s269 = sor.u32 %s267, %s268
    %s270 = ssub.s32 %s23, %s32
    %s271 = sor.u32 %s269, %s270
    %p272 = scmp.eq.s32.totalorder %s271, 0
    %s274 = sadd.s32 %s273, 1
    %s275 = scalar_select %p272, %s273, %s274
    %p278 = pneg %p272
    %p279 = scmp.eq.s32.totalorder %s14, 7
    %p280 = por %p278, %p279
    %p281 = scmp.ne.s32.totalorder %s273, %s276
    %p282 = scmp.eq.s32.totalorder %s14, 0
    %p283 = por %p281, %p282
    %p284 = scmp.ne.s32.totalorder %s273, %s276
    %p285 = scmp.eq.s32.totalorder %s19, 7
    %p286 = por %p284, %p285
    %p287 = scmp.ne.s32.totalorder %s276, %s277
    %p288 = scmp.eq.s32.totalorder %s19, 0
    %p289 = por %p287, %p288
    %p290 = scmp.ne.s32.totalorder %s276, %s277
    %p291 = scmp.eq.s32.totalorder %s20, 7
    %p292 = por %p290, %p291
    %p294 = scmp.ne.s32.totalorder %s277, %s293
    %p295 = scmp.eq.s32.totalorder %s20, 0
    %p296 = por %p294, %p295
    %p297 = scmp.le.s32.totalorder 1, %s14
    %p298 = scmp.lt.s32.totalorder %s14, 9
    %p299 = pnand %p297, %p298
    %p300 = pneg %p299
    // Predicated region
    $region9: #{hourglass3d_up.1} parent=5 // pred_check
      _
    $region10: #{hourglass3d_up.1} parent=5 // pred_check_branch
      %302 = sbr.rel (%p299) target = $region12
    $region11: #{hourglass3d_up.1} parent=5 // pred_region
      %s303 = ssub.s32 %s14, 1
      // Predicated region
      $region13: #{hourglass3d_up.1} parent=11 // pred_check
        %p304 = pneg %p166
      $region14: #{hourglass3d_up.1} parent=11 // pred_check_branch
        %306 = sbr.rel (%p304) target = $region16
      $region15: #{hourglass3d_up.1} parent=11 // pred_region
        _
      $region16: #{hourglass3d_up.1} parent=11 // pred_fallthru
        _
      // Predicated region
      $region17: #{hourglass3d_up.1} parent=11 // pred_check
        %p307 = pneg %p187
      $region18: #{hourglass3d_up.1} parent=11 // pred_check_branch
        %309 = sbr.rel (%p307) target = $region20
      $region19: #{hourglass3d_up.1} parent=11 // pred_region
        _
      $region20: #{hourglass3d_up.1} parent=11 // pred_fallthru
        _
      // Predicated region
      $region21: #{hourglass3d_up.1} parent=11 // pred_check
        %p310 = pneg %p208
      $region22: #{hourglass3d_up.1} parent=11 // pred_check_branch
        %312 = sbr.rel (%p310) target = $region24
      $region23: #{hourglass3d_up.1} parent=11 // pred_region
        _
      $region24: #{hourglass3d_up.1} parent=11 // pred_fallthru
        _
      // Predicated region
      $region25: #{hourglass3d_up.1} parent=11 // pred_check
        %p313 = pneg %p229
      $region26: #{hourglass3d_up.1} parent=11 // pred_check_branch
        %315 = sbr.rel (%p313) target = $region28
      $region27: #{hourglass3d_up.1} parent=11 // pred_region
        _
      $region28: #{hourglass3d_up.1} parent=11 // pred_fallthru
        _
    $region12: #{hourglass3d_up.1} parent=5 // pred_fallthru
      _
    %p316 = scmp.lt.s32.totalorder %s14, 8
    // Predicated region
    $region29: #{hourglass3d_up.1} parent=5 // pred_check
      %p317 = pneg %p316
    $region30: #{hourglass3d_up.1} parent=5 // pred_check_branch
      %319 = sbr.rel (%p317) target = $region32
    $region31: #{hourglass3d_up.1} parent=5 // pred_region
      // Predicated region
      $region33: #{hourglass3d_up.1} parent=31 // pred_check
        %p320 = pneg %p65
      $region34: #{hourglass3d_up.1} parent=31 // pred_check_branch
        %322 = sbr.rel (%p320) target = $region36
      $region35: #{hourglass3d_up.1} parent=31 // pred_region
        %s323 = sadd.s32 %s22, 4294967295
        %p324 = scmp.lt.s32.totalorder %s323, 3
        %s325 = scalar_select %p324, %s323, 3
        %p326 = scmp.gt.s32.totalorder %s325, 0
        %s327 = scalar_select %p326, %s325, 0
        %p328 = scmp.lt.s32.totalorder %s21, 1
        %s329 = scalar_select %p328, %s21, 1
        %p330 = scmp.lt.s32.totalorder %s327, 3
        %s331 = scalar_select %p330, %s327, 3
        %s332 = smul.addr %s331, 8
        %s333 = smul.addr %s329, 32
        %s334 = sadd.s32 %s332, %s333
        %s335 = smul.addr %s334, 8
        %s336 = scalar_lea.vmem %s0, %s335
        %s337 = sadd.s32 %s22, 4294967295
        %p338 = scmp.lt.s32.totalorder %s337, 3
        %s339 = scalar_select %p338, %s337, 3
        %p340 = scmp.gt.s32.totalorder %s339, 0
        %s341 = scalar_select %p340, %s339, 0
      $region36: #{hourglass3d_up.1} parent=31 // pred_fallthru
        _
      // Predicated region
      $region37: #{hourglass3d_up.1} parent=31 // pred_check
        %p342 = pneg %p101
      $region38: #{hourglass3d_up.1} parent=31 // pred_check_branch
        %344 = sbr.rel (%p342) target = $region40
      $region39: #{hourglass3d_up.1} parent=31 // pred_region
        %p345 = scmp.lt.s32.totalorder %s22, 3
        %s346 = scalar_select %p345, %s22, 3
        %p347 = scmp.gt.s32.totalorder %s346, 0
        %s348 = scalar_select %p347, %s346, 0
        %p349 = scmp.lt.s32.totalorder %s21, 1
        %s350 = scalar_select %p349, %s21, 1
        %p351 = scmp.lt.s32.totalorder %s348, 3
        %s352 = scalar_select %p351, %s348, 3
        %s353 = smul.addr %s352, 8
        %s354 = smul.addr %s350, 32
        %s355 = sadd.s32 %s353, %s354
        %s356 = smul.addr %s355, 8
        %s357 = scalar_lea.vmem %s1, %s356
        %p358 = scmp.lt.s32.totalorder %s22, 3
        %s359 = scalar_select %p358, %s22, 3
        %p360 = scmp.gt.s32.totalorder %s359, 0
        %s361 = scalar_select %p360, %s359, 0
      $region40: #{hourglass3d_up.1} parent=31 // pred_fallthru
        _
      // Predicated region
      $region41: #{hourglass3d_up.1} parent=31 // pred_check
        %p362 = pneg %p139
      $region42: #{hourglass3d_up.1} parent=31 // pred_check_branch
        %364 = sbr.rel (%p362) target = $region44
      $region43: #{hourglass3d_up.1} parent=31 // pred_region
        %s365 = sadd.s32 %s22, 1
        %p366 = scmp.lt.s32.totalorder %s365, 3
        %s367 = scalar_select %p366, %s365, 3
        %p368 = scmp.gt.s32.totalorder %s367, 0
        %s369 = scalar_select %p368, %s367, 0
        %p370 = scmp.lt.s32.totalorder %s21, 1
        %s371 = scalar_select %p370, %s21, 1
        %p372 = scmp.lt.s32.totalorder %s369, 3
        %s373 = scalar_select %p372, %s369, 3
        %s374 = smul.addr %s373, 8
        %s375 = smul.addr %s371, 32
        %s376 = sadd.s32 %s374, %s375
        %s377 = smul.addr %s376, 8
        %s378 = scalar_lea.vmem %s2, %s377
        %s379 = sadd.s32 %s22, 1
        %p380 = scmp.lt.s32.totalorder %s379, 3
        %s381 = scalar_select %p380, %s379, 3
        %p382 = scmp.gt.s32.totalorder %s381, 0
        %s383 = scalar_select %p382, %s381, 0
      $region44: #{hourglass3d_up.1} parent=31 // pred_fallthru
        _
      // Predicated region
      $region45: #{hourglass3d_up.1} parent=31 // pred_check
        %p384 = pneg %p253
      $region46: #{hourglass3d_up.1} parent=31 // pred_check_branch
        %386 = sbr.rel (%p384) target = $region48
      $region47: #{hourglass3d_up.1} parent=31 // pred_region
        %s387 = smul.u32 8, %s23
        %p388 = scmp.lt.s32.totalorder %s21, 1
        %s389 = scalar_select %p388, %s21, 1
        %p390 = scmp.lt.s32.totalorder %s22, 3
        %s391 = scalar_select %p390, %s22, 3
        %p392 = scmp.lt.s32.totalorder %s387, 7
        %s393 = scalar_select %p392, %s387, 7
        %s394 = smul.addr %s391, 8
        %s395 = sadd.s32 %s393, %s394
        %s396 = smul.addr %s389, 32
        %s397 = sadd.s32 %s395, %s396
        %s398 = smul.addr %s397, 8
        %s399 = scalar_lea.vmem %s7, %s398
        %s400 = smul.u32 8, %s23
      $region48: #{hourglass3d_up.1} parent=31 // pred_fallthru
        _
    $region32: #{hourglass3d_up.1} parent=5 // pred_fallthru
      _
    %p401 = scmp.le.s32.totalorder 1, %s14
    %p402 = scmp.lt.s32.totalorder %s14, 9
    %p403 = pnand %p401, %p402
    %p404 = pneg %p403
    // Predicated region
    $region49: #{hourglass3d_up.1} parent=5 // pred_check
      _
    $region50: #{hourglass3d_up.1} parent=5 // pred_check_branch
      %406 = sbr.rel (%p403) target = $region52
    $region51: #{hourglass3d_up.1} parent=5 // pred_region
      %s407 = ssub.s32 %s14, 1
      %s408 = sadd.s32 %s25, 4294967295
      %p409 = scmp.lt.s32.totalorder %s408, 3
      %s410 = scalar_select %p409, %s408, 3
      %p411 = scmp.gt.s32.totalorder %s410, 0
      %s412 = scalar_select %p411, %s410, 0
      %p413 = scmp.lt.s32.totalorder %s24, 1
      %s414 = scalar_select %p413, %s24, 1
      %p415 = scmp.lt.s32.totalorder %s412, 3
      %s416 = scalar_select %p415, %s412, 3
      %s417 = smul.addr %s416, 8
      %s418 = smul.addr %s414, 32
      %s419 = sadd.s32 %s417, %s418
      %s420 = smul.addr %s419, 8
      %s421 = scalar_lea.vmem %s0, %s420
      %p422 = pneg %p71
      %p423 = pneg %p68
      %p424 = scmp.lt.s32.totalorder %s25, 3
      %s425 = scalar_select %p424, %s25, 3
      %p426 = scmp.gt.s32.totalorder %s425, 0
      %s427 = scalar_select %p426, %s425, 0
      %p428 = scmp.lt.s32.totalorder %s24, 1
      %s429 = scalar_select %p428, %s24, 1
      %p430 = scmp.lt.s32.totalorder %s427, 3
      %s431 = scalar_select %p430, %s427, 3
      %s432 = smul.addr %s431, 8
      %s433 = smul.addr %s429, 32
      %s434 = sadd.s32 %s432, %s433
      %s435 = smul.addr %s434, 8
      %s436 = scalar_lea.vmem %s1, %s435
      %p437 = pneg %p107
      %p438 = pneg %p104
      %s439 = sadd.s32 %s25, 1
      %p440 = scmp.lt.s32.totalorder %s439, 3
      %s441 = scalar_select %p440, %s439, 3
      %p442 = scmp.gt.s32.totalorder %s441, 0
      %s443 = scalar_select %p442, %s441, 0
      %p444 = scmp.lt.s32.totalorder %s24, 1
      %s445 = scalar_select %p444, %s24, 1
      %p446 = scmp.lt.s32.totalorder %s443, 3
      %s447 = scalar_select %p446, %s443, 3
      %s448 = smul.addr %s447, 8
      %s449 = smul.addr %s445, 32
      %s450 = sadd.s32 %s448, %s449
      %s451 = smul.addr %s450, 8
      %s452 = scalar_lea.vmem %s2, %s451
      %p453 = pneg %p145
      %p454 = pneg %p142
      %p455 = pneg %p166
      %p456 = pneg %p163
      %p457 = pneg %p187
      %p458 = pneg %p184
      %p459 = pneg %p208
      %p460 = pneg %p205
      %p461 = pneg %p229
      %p462 = pneg %p226
      %s463 = smul.u32 8, %s26
      %p464 = scmp.lt.s32.totalorder %s24, 1
      %s465 = scalar_select %p464, %s24, 1
      %p466 = scmp.lt.s32.totalorder %s25, 3
      %s467 = scalar_select %p466, %s25, 3
      %p468 = scmp.lt.s32.totalorder %s463, 7
      %s469 = scalar_select %p468, %s463, 7
      %s470 = smul.addr %s467, 8
      %s471 = sadd.s32 %s469, %s470
      %s472 = smul.addr %s465, 32
      %s473 = sadd.s32 %s471, %s472
      %s474 = smul.addr %s473, 8
      %s475 = scalar_lea.vmem %s7, %s474
      %p476 = pneg %p259
      %p477 = pneg %p256
      %p478 = pneg %p289
      %p479 = pneg %p286
      %s480 = smul.u32 8, %s26
      %p481 = scmp.lt.s32.totalorder %s24, 1
      %s482 = scalar_select %p481, %s24, 1
      %p483 = scmp.lt.s32.totalorder %s25, 3
      %s484 = scalar_select %p483, %s25, 3
      %p485 = scmp.lt.s32.totalorder %s480, 7
      %s486 = scalar_select %p485, %s480, 7
      %s487 = smul.addr %s484, 8
      %s488 = sadd.s32 %s486, %s487
      %s489 = smul.addr %s482, 32
      %s490 = sadd.s32 %s488, %s489
      %s491 = smul.addr %s490, 8
      %s492 = scalar_lea.vmem %s8, %s491
      %s493 = sadd.s32 %s25, 4294967295
      %p494 = scmp.lt.s32.totalorder %s493, 3
      %s495 = scalar_select %p494, %s493, 3
      %p496 = scmp.gt.s32.totalorder %s495, 0
      %s497 = scalar_select %p496, %s495, 0
      %p498 = scmp.lt.s32.totalorder %s24, 1
      %s499 = scalar_select %p498, %s24, 1
      %p500 = scmp.lt.s32.totalorder %s497, 3
      %s501 = scalar_select %p500, %s497, 3
      %s502 = smul.addr %s501, 8
      %s503 = smul.addr %s499, 32
      %s504 = sadd.s32 %s502, %s503
      %s505 = smul.addr %s504, 8
      %s506 = scalar_lea.vmem %s0, %s505
      %s507 = sadd.s32 %s25, 4294967295
      %p508 = scmp.lt.s32.totalorder %s507, 3
      %s509 = scalar_select %p508, %s507, 3
      %p510 = scmp.gt.s32.totalorder %s509, 0
      %s511 = scalar_select %p510, %s509, 0
      %p512 = scmp.lt.s32.totalorder %s25, 3
      %s513 = scalar_select %p512, %s25, 3
      %p514 = scmp.gt.s32.totalorder %s513, 0
      %s515 = scalar_select %p514, %s513, 0
      %p516 = scmp.lt.s32.totalorder %s24, 1
      %s517 = scalar_select %p516, %s24, 1
      %p518 = scmp.lt.s32.totalorder %s515, 3
      %s519 = scalar_select %p518, %s515, 3
      %s520 = smul.addr %s519, 8
      %s521 = smul.addr %s517, 32
      %s522 = sadd.s32 %s520, %s521
      %s523 = smul.addr %s522, 8
      %s524 = scalar_lea.vmem %s1, %s523
      %p525 = scmp.lt.s32.totalorder %s25, 3
      %s526 = scalar_select %p525, %s25, 3
      %p527 = scmp.gt.s32.totalorder %s526, 0
      %s528 = scalar_select %p527, %s526, 0
      %s529 = sadd.s32 %s25, 1
      %p530 = scmp.lt.s32.totalorder %s529, 3
      %s531 = scalar_select %p530, %s529, 3
      %p532 = scmp.gt.s32.totalorder %s531, 0
      %s533 = scalar_select %p532, %s531, 0
      %p534 = scmp.lt.s32.totalorder %s24, 1
      %s535 = scalar_select %p534, %s24, 1
      %p536 = scmp.lt.s32.totalorder %s533, 3
      %s537 = scalar_select %p536, %s533, 3
      %s538 = smul.addr %s537, 8
      %s539 = smul.addr %s535, 32
      %s540 = sadd.s32 %s538, %s539
      %s541 = smul.addr %s540, 8
      %s542 = scalar_lea.vmem %s2, %s541
      %s543 = sadd.s32 %s25, 1
      %p544 = scmp.lt.s32.totalorder %s543, 3
      %s545 = scalar_select %p544, %s543, 3
      %p546 = scmp.gt.s32.totalorder %s545, 0
      %s547 = scalar_select %p546, %s545, 0
      %s548 = smul.u32 8, %s26
      %p549 = scmp.lt.s32.totalorder %s24, 1
      %s550 = scalar_select %p549, %s24, 1
      %p551 = scmp.lt.s32.totalorder %s25, 3
      %s552 = scalar_select %p551, %s25, 3
      %p553 = scmp.lt.s32.totalorder %s548, 7
      %s554 = scalar_select %p553, %s548, 7
      %s555 = smul.addr %s552, 8
      %s556 = sadd.s32 %s554, %s555
      %s557 = smul.addr %s550, 32
      %s558 = sadd.s32 %s556, %s557
      %s559 = smul.addr %s558, 8
      %s560 = scalar_lea.vmem %s7, %s559
      %s561 = smul.u32 8, %s26
      %s562 = smul.u32 8, %s26
      %p563 = scmp.lt.s32.totalorder %s24, 1
      %s564 = scalar_select %p563, %s24, 1
      %p565 = scmp.lt.s32.totalorder %s25, 3
      %s566 = scalar_select %p565, %s25, 3
      %p567 = scmp.lt.s32.totalorder %s562, 7
      %s568 = scalar_select %p567, %s562, 7
      %s569 = smul.addr %s566, 8
      %s570 = sadd.s32 %s568, %s569
      %s571 = smul.addr %s564, 32
      %s572 = sadd.s32 %s570, %s571
      %s573 = smul.addr %s572, 8
      %s574 = scalar_lea.vmem %s8, %s573
      %s575 = smul.u32 8, %s26
      %p576 = scmp.eq.s32.totalorder %s26, 0
      // Predicated region
      $region53: #{hourglass3d_up.1} parent=51 // pred_check
        %p577 = pneg %p576
      $region54: #{hourglass3d_up.1} parent=51 // pred_check_branch
        %579 = sbr.rel (%p577) target = $region56
      $region55: #{hourglass3d_up.1} parent=51 // pred_region
        %v580 = vld [vmem:[%s506] sm:$0xff]
        %v581 = vld [vmem:[%s506 + $0x8] sm:$0xff]
        %v582 = vld [vmem:[%s506 + $0x10] sm:$0xff]
        %v583 = vld [vmem:[%s506 + $0x18] sm:$0xff]
        %v584 = vld [vmem:[%s506 + $0x20] sm:$0xff]
        %v585 = vld [vmem:[%s506 + $0x28] sm:$0xff]
        %v586 = vld [vmem:[%s506 + $0x30] sm:$0xff]
        %v587 = vld [vmem:[%s506 + $0x38] sm:$0xff]
        %v588 = vld [vmem:[%s524] sm:$0xff]
        %v589 = vld [vmem:[%s524 + $0x8] sm:$0xff]
        %v590 = vld [vmem:[%s524 + $0x10] sm:$0xff]
        %v591 = vld [vmem:[%s524 + $0x18] sm:$0xff]
        %v592 = vld [vmem:[%s524 + $0x20] sm:$0xff]
        %v593 = vld [vmem:[%s524 + $0x28] sm:$0xff]
        %v594 = vld [vmem:[%s524 + $0x30] sm:$0xff]
        %v595 = vld [vmem:[%s524 + $0x38] sm:$0xff]
        %v596 = vld [vmem:[%s542] sm:$0xff]
        %v597 = vld [vmem:[%s542 + $0x8] sm:$0xff]
        %v598 = vld [vmem:[%s542 + $0x10] sm:$0xff]
        %v599 = vld [vmem:[%s542 + $0x18] sm:$0xff]
        %v600 = vld [vmem:[%s542 + $0x20] sm:$0xff]
        %v601 = vld [vmem:[%s542 + $0x28] sm:$0xff]
        %v602 = vld [vmem:[%s542 + $0x30] sm:$0xff]
        %v603 = vld [vmem:[%s542 + $0x38] sm:$0xff]
        %612 = vrot.lane.b32.xlu0 %v588, 4
        %v613 = vpop.permute.xlu0 %612
        %614 = vrot.lane.b32.xlu0 %v589, 4
        %v615 = vpop.permute.xlu0 %614
        %616 = vrot.lane.b32.xlu0 %v590, 4
        %v617 = vpop.permute.xlu0 %616
        %618 = vrot.lane.b32.xlu0 %v591, 4
        %v619 = vpop.permute.xlu0 %618
        %620 = vrot.lane.b32.xlu0 %v592, 4
        %v621 = vpop.permute.xlu0 %620
        %622 = vrot.lane.b32.xlu0 %v593, 4
        %v623 = vpop.permute.xlu0 %622
        %624 = vrot.lane.b32.xlu0 %v594, 4
        %v625 = vpop.permute.xlu0 %624
        %626 = vrot.lane.b32.xlu0 %v595, 4
        %v627 = vpop.permute.xlu0 %626
        %644 = vrot.lane.b32.xlu0 %v596, 8
        %v645 = vpop.permute.xlu0 %644
        %646 = vrot.lane.b32.xlu0 %v597, 8
        %v647 = vpop.permute.xlu0 %646
        %648 = vrot.lane.b32.xlu0 %v598, 8
        %v649 = vpop.permute.xlu0 %648
        %650 = vrot.lane.b32.xlu0 %v599, 8
        %v651 = vpop.permute.xlu0 %650
        %652 = vrot.lane.b32.xlu0 %v600, 8
        %v653 = vpop.permute.xlu0 %652
        %654 = vrot.lane.b32.xlu0 %v601, 8
        %v655 = vpop.permute.xlu0 %654
        %656 = vrot.lane.b32.xlu0 %v602, 8
        %v657 = vpop.permute.xlu0 %656
        %658 = vrot.lane.b32.xlu0 %v603, 8
        %v659 = vpop.permute.xlu0 %658
        %vm668 = vcmask 31744
        %v669 = vsel %vm668, %v580, %v613
        %v670 = vsel %vm668, %v581, %v615
        %v671 = vsel %vm668, %v582, %v617
        %v672 = vsel %vm668, %v583, %v619
        %v673 = vsel %vm668, %v584, %v621
        %v674 = vsel %vm668, %v585, %v623
        %v675 = vsel %vm668, %v586, %v625
        %v676 = vsel %vm668, %v587, %v627
        %vm677 = vcmask 64512
        %v678 = vsel %vm677, %v669, %v645
        %v679 = vsel %vm677, %v670, %v647
        %v680 = vsel %vm677, %v671, %v649
        %v681 = vsel %vm677, %v672, %v651
        %v682 = vsel %vm677, %v673, %v653
        %v683 = vsel %vm677, %v674, %v655
        %v684 = vsel %vm677, %v675, %v657
        %v685 = vsel %vm677, %v676, %v659
        %v686 = vld [vmem:[%s4] sm:$0x1]
        %v688 = vlaneseq
        %v689 = vshrl.u32 %v688, 7
        %v690 = vsub.s32 0, %v689
        %v691 = vrot.slane %v686, %v690
        %v693 = vmul.f32 %v678, %v691
        %v694 = vmul.f32 %v679, %v691
        %v695 = vmul.f32 %v680, %v691
        %v696 = vmul.f32 %v681, %v691
        %v697 = vmul.f32 %v682, %v691
        %v698 = vmul.f32 %v683, %v691
        %v699 = vmul.f32 %v684, %v691
        %v700 = vmul.f32 %v685, %v691
        %v701 = vld [vmem:[%s5] sm:$0x1]
        %v703 = vlaneseq
        %v704 = vshrl.u32 %v703, 7
        %v705 = vsub.s32 0, %v704
        %v706 = vrot.slane %v701, %v705
        %v708 = vadd.f32 %v693, %v706
        %v709 = vadd.f32 %v694, %v706
        %v710 = vadd.f32 %v695, %v706
        %v711 = vadd.f32 %v696, %v706
        %v712 = vadd.f32 %v697, %v706
        %v713 = vadd.f32 %v698, %v706
        %v714 = vadd.f32 %v699, %v706
        %v715 = vadd.f32 %v700, %v706
        %v716 = vmax.f32 %v708, 0.0
        %v717 = vmax.f32 %v709, 0.0
        %v718 = vmax.f32 %v710, 0.0
        %v719 = vmax.f32 %v711, 0.0
        %v720 = vmax.f32 %v712, 0.0
        %v721 = vmax.f32 %v713, 0.0
        %v722 = vmax.f32 %v714, 0.0
        %v723 = vmax.f32 %v715, 0.0
        %v724 = vlaneseq
        %v725 = vand.u32 %v724, 127
        %vm726 = vcmp.ge.s32.totalorder %v725, 4
        %p727 = scmp.ge.s32.totalorder %s25, 1
        %s728 = scalar_select %p727, 1, 0
        %v729 = vstv %s728
        %vm730 = vcmp.eq.s32.totalorder %v729, 1
        %vm731 = vmor %vm726, %vm730
        %vm732 = vcmp.lt.s32.totalorder %v725, 8
        %p733 = scmp.lt.s32.totalorder %s25, 3
        %s734 = scalar_select %p733, 1, 0
        %v735 = vstv %s734
        %vm736 = vcmp.eq.s32.totalorder %v735, 1
        %vm737 = vmor %vm732, %vm736
        %vm738 = vmand %vm731, %vm737
        %v739 = vsel %vm738, 1, 0
        %vm740 = vcmp.eq.s32.totalorder %v739, 1
        %v741 = vsel %vm740, %v716, 0.0
        %v742 = vsel %vm740, %v717, 0.0
        %v743 = vsel %vm740, %v718, 0.0
        %v744 = vsel %vm740, %v719, 0.0
        %v745 = vsel %vm740, %v720, 0.0
        %v746 = vsel %vm740, %v721, 0.0
        %v747 = vsel %vm740, %v722, 0.0
        %v748 = vsel %vm740, %v723, 0.0
        %v757 = vrot.slane %v741, 7
        %v758 = vrot.slane %v742, 7
        %v759 = vrot.slane %v743, 7
        %v760 = vrot.slane %v744, 7
        %v761 = vrot.slane %v745, 7
        %v762 = vrot.slane %v746, 7
        %v763 = vrot.slane %v747, 7
        %v764 = vrot.slane %v748, 7
        %vm773 = vcmask 1040384
        %v774 = vsel %vm773, 0.0, %v757
        %v775 = vsel %vm773, 0.0, %v758
        %v776 = vsel %vm773, 0.0, %v759
        %v777 = vsel %vm773, 0.0, %v760
        %v778 = vsel %vm773, 0.0, %v761
        %v779 = vsel %vm773, 0.0, %v762
        %v780 = vsel %vm773, 0.0, %v763
        %v781 = vsel %vm773, 0.0, %v764
        %v782 = vsel %vm773, %v757, 0.0
        %v783 = vsel %vm773, %v758, 0.0
        %v784 = vsel %vm773, %v759, 0.0
        %v785 = vsel %vm773, %v760, 0.0
        %v786 = vsel %vm773, %v761, 0.0
        %v787 = vsel %vm773, %v762, 0.0
        %v788 = vsel %vm773, %v763, 0.0
        %v789 = vsel %vm773, %v764, 0.0
        %s790 = scalar_lea.vmem [#allocation2], 16
        %vm791 = vcmask 97280
        %792 = vst.msk [vmem:[%s790] sm:$0xff] %vm791, %v774
        %vm793 = vcmask 91136
        %794 = vst.msk [vmem:[%s790 + $0x8] sm:$0x3] %vm793, %v782
        %795 = vst.msk [vmem:[%s790 + $0x10] sm:$0xff] %vm791, %v775
        %796 = vst.msk [vmem:[%s790 + $0x18] sm:$0x3] %vm793, %v783
        %797 = vst.msk [vmem:[%s790 + $0x20] sm:$0xff] %vm791, %v776
        %798 = vst.msk [vmem:[%s790 + $0x28] sm:$0x3] %vm793, %v784
        %799 = vst.msk [vmem:[%s790 + $0x30] sm:$0xff] %vm791, %v777
        %800 = vst.msk [vmem:[%s790 + $0x38] sm:$0x3] %vm793, %v785
        %801 = vst.msk [vmem:[%s790 + $0x40] sm:$0xff] %vm791, %v778
        %802 = vst.msk [vmem:[%s790 + $0x48] sm:$0x3] %vm793, %v786
        %803 = vst.msk [vmem:[%s790 + $0x50] sm:$0xff] %vm791, %v779
        %804 = vst.msk [vmem:[%s790 + $0x58] sm:$0x3] %vm793, %v787
        %805 = vst.msk [vmem:[%s790 + $0x60] sm:$0xff] %vm791, %v780
        %806 = vst.msk [vmem:[%s790 + $0x68] sm:$0x3] %vm793, %v788
        %807 = vst.msk [vmem:[%s790 + $0x70] sm:$0xff] %vm791, %v781
        %808 = vst.msk [vmem:[%s790 + $0x78] sm:$0x3] %vm793, %v789
        %809 = vst.msk [vmem:[#allocation2] sm:$0xff] %vm791, 0.0
        %810 = vst.msk [vmem:[#allocation2 + $0x8] sm:$0x3] %vm793, 0.0
        %s811 = scalar_lea.vmem [#allocation2], 144
        %812 = vst.msk [vmem:[%s811] sm:$0xff] %vm791, 0.0
        %813 = vst.msk [vmem:[%s811 + $0x8] sm:$0x3] %vm793, 0.0
      $region56: #{hourglass3d_up.1} parent=51 // pred_fallthru
        _
      %s814 = smul.u32 %s26, 8
      %s815 = smul.u32 %s814, 16
      %s816 = scalar_lea.vmem [#allocation2], %s815
      %v817 = vld [vmem:[%s816] sm:$0xff]
      %v818 = vld [vmem:[%s816 + $0x10] sm:$0xff]
      %v819 = vld [vmem:[%s816 + $0x20] sm:$0xff]
      %v820 = vld [vmem:[%s816 + $0x30] sm:$0xff]
      %v821 = vld [vmem:[%s816 + $0x40] sm:$0xff]
      %v822 = vld [vmem:[%s816 + $0x50] sm:$0xff]
      %v823 = vld [vmem:[%s816 + $0x60] sm:$0xff]
      %v824 = vld [vmem:[%s816 + $0x70] sm:$0xff]
      %v825 = vld [vmem:[%s816 + $0x1] sm:$0xff]
      %v826 = vld [vmem:[%s816 + $0x11] sm:$0xff]
      %v827 = vld [vmem:[%s816 + $0x21] sm:$0xff]
      %v828 = vld [vmem:[%s816 + $0x31] sm:$0xff]
      %v829 = vld [vmem:[%s816 + $0x41] sm:$0xff]
      %v830 = vld [vmem:[%s816 + $0x51] sm:$0xff]
      %v831 = vld [vmem:[%s816 + $0x61] sm:$0xff]
      %v832 = vld [vmem:[%s816 + $0x71] sm:$0xff]
      %v833 = vld [vmem:[%s816 + $0x2] sm:$0xff]
      %v834 = vld [vmem:[%s816 + $0x12] sm:$0xff]
      %v835 = vld [vmem:[%s816 + $0x22] sm:$0xff]
      %v836 = vld [vmem:[%s816 + $0x32] sm:$0xff]
      %v837 = vld [vmem:[%s816 + $0x42] sm:$0xff]
      %v838 = vld [vmem:[%s816 + $0x52] sm:$0xff]
      %v839 = vld [vmem:[%s816 + $0x62] sm:$0xff]
      %v840 = vld [vmem:[%s816 + $0x72] sm:$0xff]
      %s841 = sadd.s32 %s814, 1
      %s842 = smul.u32 %s841, 16
      %s843 = scalar_lea.vmem [#allocation2], %s842
      %v844 = vld [vmem:[%s843] sm:$0xff]
      %v845 = vld [vmem:[%s843 + $0x10] sm:$0xff]
      %v846 = vld [vmem:[%s843 + $0x20] sm:$0xff]
      %v847 = vld [vmem:[%s843 + $0x30] sm:$0xff]
      %v848 = vld [vmem:[%s843 + $0x40] sm:$0xff]
      %v849 = vld [vmem:[%s843 + $0x50] sm:$0xff]
      %v850 = vld [vmem:[%s843 + $0x60] sm:$0xff]
      %v851 = vld [vmem:[%s843 + $0x70] sm:$0xff]
      %v852 = vld [vmem:[%s843 + $0x1] sm:$0xff]
      %v853 = vld [vmem:[%s843 + $0x11] sm:$0xff]
      %v854 = vld [vmem:[%s843 + $0x21] sm:$0xff]
      %v855 = vld [vmem:[%s843 + $0x31] sm:$0xff]
      %v856 = vld [vmem:[%s843 + $0x41] sm:$0xff]
      %v857 = vld [vmem:[%s843 + $0x51] sm:$0xff]
      %v858 = vld [vmem:[%s843 + $0x61] sm:$0xff]
      %v859 = vld [vmem:[%s843 + $0x71] sm:$0xff]
      %v860 = vld [vmem:[%s843 + $0x2] sm:$0xff]
      %v861 = vld [vmem:[%s843 + $0x12] sm:$0xff]
      %v862 = vld [vmem:[%s843 + $0x22] sm:$0xff]
      %v863 = vld [vmem:[%s843 + $0x32] sm:$0xff]
      %v864 = vld [vmem:[%s843 + $0x42] sm:$0xff]
      %v865 = vld [vmem:[%s843 + $0x52] sm:$0xff]
      %v866 = vld [vmem:[%s843 + $0x62] sm:$0xff]
      %v867 = vld [vmem:[%s843 + $0x72] sm:$0xff]
      %s868 = sadd.s32 %s814, 2
      %s869 = smul.u32 %s868, 16
      %s870 = scalar_lea.vmem [#allocation2], %s869
      %v871 = vld [vmem:[%s870] sm:$0xff]
      %v872 = vld [vmem:[%s870 + $0x10] sm:$0xff]
      %v873 = vld [vmem:[%s870 + $0x20] sm:$0xff]
      %v874 = vld [vmem:[%s870 + $0x30] sm:$0xff]
      %v875 = vld [vmem:[%s870 + $0x40] sm:$0xff]
      %v876 = vld [vmem:[%s870 + $0x50] sm:$0xff]
      %v877 = vld [vmem:[%s870 + $0x60] sm:$0xff]
      %v878 = vld [vmem:[%s870 + $0x70] sm:$0xff]
      %v879 = vld [vmem:[%s870 + $0x1] sm:$0xff]
      %v880 = vld [vmem:[%s870 + $0x11] sm:$0xff]
      %v881 = vld [vmem:[%s870 + $0x21] sm:$0xff]
      %v882 = vld [vmem:[%s870 + $0x31] sm:$0xff]
      %v883 = vld [vmem:[%s870 + $0x41] sm:$0xff]
      %v884 = vld [vmem:[%s870 + $0x51] sm:$0xff]
      %v885 = vld [vmem:[%s870 + $0x61] sm:$0xff]
      %v886 = vld [vmem:[%s870 + $0x71] sm:$0xff]
      %v887 = vld [vmem:[%s870 + $0x2] sm:$0xff]
      %v888 = vld [vmem:[%s870 + $0x12] sm:$0xff]
      %v889 = vld [vmem:[%s870 + $0x22] sm:$0xff]
      %v890 = vld [vmem:[%s870 + $0x32] sm:$0xff]
      %v891 = vld [vmem:[%s870 + $0x42] sm:$0xff]
      %v892 = vld [vmem:[%s870 + $0x52] sm:$0xff]
      %v893 = vld [vmem:[%s870 + $0x62] sm:$0xff]
      %v894 = vld [vmem:[%s870 + $0x72] sm:$0xff]
      %903 = vrot.lane.b32.xlu0 %v825, 12
      %v904 = vpop.permute.xlu0 %903
      %905 = vrot.lane.b32.xlu0 %v826, 12
      %v906 = vpop.permute.xlu0 %905
      %907 = vrot.lane.b32.xlu0 %v827, 12
      %v908 = vpop.permute.xlu0 %907
      %909 = vrot.lane.b32.xlu0 %v828, 12
      %v910 = vpop.permute.xlu0 %909
      %911 = vrot.lane.b32.xlu0 %v829, 12
      %v912 = vpop.permute.xlu0 %911
      %913 = vrot.lane.b32.xlu0 %v830, 12
      %v914 = vpop.permute.xlu0 %913
      %915 = vrot.lane.b32.xlu0 %v831, 12
      %v916 = vpop.permute.xlu0 %915
      %917 = vrot.lane.b32.xlu0 %v832, 12
      %v918 = vpop.permute.xlu0 %917
      %935 = vrot.lane.b32.xlu0 %v833, 24
      %v936 = vpop.permute.xlu0 %935
      %937 = vrot.lane.b32.xlu0 %v834, 24
      %v938 = vpop.permute.xlu0 %937
      %939 = vrot.lane.b32.xlu0 %v835, 24
      %v940 = vpop.permute.xlu0 %939
      %941 = vrot.lane.b32.xlu0 %v836, 24
      %v942 = vpop.permute.xlu0 %941
      %943 = vrot.lane.b32.xlu0 %v837, 24
      %v944 = vpop.permute.xlu0 %943
      %945 = vrot.lane.b32.xlu0 %v838, 24
      %v946 = vpop.permute.xlu0 %945
      %947 = vrot.lane.b32.xlu0 %v839, 24
      %v948 = vpop.permute.xlu0 %947
      %949 = vrot.lane.b32.xlu0 %v840, 24
      %v950 = vpop.permute.xlu0 %949
      %967 = vrot.lane.b32.xlu0 %v844, 36
      %v968 = vpop.permute.xlu0 %967
      %969 = vrot.lane.b32.xlu0 %v845, 36
      %v970 = vpop.permute.xlu0 %969
      %971 = vrot.lane.b32.xlu0 %v846, 36
      %v972 = vpop.permute.xlu0 %971
      %973 = vrot.lane.b32.xlu0 %v847, 36
      %v974 = vpop.permute.xlu0 %973
      %975 = vrot.lane.b32.xlu0 %v848, 36
      %v976 = vpop.permute.xlu0 %975
      %977 = vrot.lane.b32.xlu0 %v849, 36
      %v978 = vpop.permute.xlu0 %977
      %979 = vrot.lane.b32.xlu0 %v850, 36
      %v980 = vpop.permute.xlu0 %979
      %981 = vrot.lane.b32.xlu0 %v851, 36
      %v982 = vpop.permute.xlu0 %981
      %999 = vrot.lane.b32.xlu0 %v852, 48
      %v1000 = vpop.permute.xlu0 %999
      %1001 = vrot.lane.b32.xlu0 %v853, 48
      %v1002 = vpop.permute.xlu0 %1001
      %1003 = vrot.lane.b32.xlu0 %v854, 48
      %v1004 = vpop.permute.xlu0 %1003
      %1005 = vrot.lane.b32.xlu0 %v855, 48
      %v1006 = vpop.permute.xlu0 %1005
      %1007 = vrot.lane.b32.xlu0 %v856, 48
      %v1008 = vpop.permute.xlu0 %1007
      %1009 = vrot.lane.b32.xlu0 %v857, 48
      %v1010 = vpop.permute.xlu0 %1009
      %1011 = vrot.lane.b32.xlu0 %v858, 48
      %v1012 = vpop.permute.xlu0 %1011
      %1013 = vrot.lane.b32.xlu0 %v859, 48
      %v1014 = vpop.permute.xlu0 %1013
      %1031 = vrot.lane.b32.xlu0 %v860, 60
      %v1032 = vpop.permute.xlu0 %1031
      %1033 = vrot.lane.b32.xlu0 %v861, 60
      %v1034 = vpop.permute.xlu0 %1033
      %1035 = vrot.lane.b32.xlu0 %v862, 60
      %v1036 = vpop.permute.xlu0 %1035
      %1037 = vrot.lane.b32.xlu0 %v863, 60
      %v1038 = vpop.permute.xlu0 %1037
      %1039 = vrot.lane.b32.xlu0 %v864, 60
      %v1040 = vpop.permute.xlu0 %1039
      %1041 = vrot.lane.b32.xlu0 %v865, 60
      %v1042 = vpop.permute.xlu0 %1041
      %1043 = vrot.lane.b32.xlu0 %v866, 60
      %v1044 = vpop.permute.xlu0 %1043
      %1045 = vrot.lane.b32.xlu0 %v867, 60
      %v1046 = vpop.permute.xlu0 %1045
      %1063 = vrot.lane.b32.xlu0 %v871, 72
      %v1064 = vpop.permute.xlu0 %1063
      %1065 = vrot.lane.b32.xlu0 %v872, 72
      %v1066 = vpop.permute.xlu0 %1065
      %1067 = vrot.lane.b32.xlu0 %v873, 72
      %v1068 = vpop.permute.xlu0 %1067
      %1069 = vrot.lane.b32.xlu0 %v874, 72
      %v1070 = vpop.permute.xlu0 %1069
      %1071 = vrot.lane.b32.xlu0 %v875, 72
      %v1072 = vpop.permute.xlu0 %1071
      %1073 = vrot.lane.b32.xlu0 %v876, 72
      %v1074 = vpop.permute.xlu0 %1073
      %1075 = vrot.lane.b32.xlu0 %v877, 72
      %v1076 = vpop.permute.xlu0 %1075
      %1077 = vrot.lane.b32.xlu0 %v878, 72
      %v1078 = vpop.permute.xlu0 %1077
      %1095 = vrot.lane.b32.xlu0 %v879, 84
      %v1096 = vpop.permute.xlu0 %1095
      %1097 = vrot.lane.b32.xlu0 %v880, 84
      %v1098 = vpop.permute.xlu0 %1097
      %1099 = vrot.lane.b32.xlu0 %v881, 84
      %v1100 = vpop.permute.xlu0 %1099
      %1101 = vrot.lane.b32.xlu0 %v882, 84
      %v1102 = vpop.permute.xlu0 %1101
      %1103 = vrot.lane.b32.xlu0 %v883, 84
      %v1104 = vpop.permute.xlu0 %1103
      %1105 = vrot.lane.b32.xlu0 %v884, 84
      %v1106 = vpop.permute.xlu0 %1105
      %1107 = vrot.lane.b32.xlu0 %v885, 84
      %v1108 = vpop.permute.xlu0 %1107
      %1109 = vrot.lane.b32.xlu0 %v886, 84
      %v1110 = vpop.permute.xlu0 %1109
      %1127 = vrot.lane.b32.xlu0 %v887, 96
      %v1128 = vpop.permute.xlu0 %1127
      %1129 = vrot.lane.b32.xlu0 %v888, 96
      %v1130 = vpop.permute.xlu0 %1129
      %1131 = vrot.lane.b32.xlu0 %v889, 96
      %v1132 = vpop.permute.xlu0 %1131
      %1133 = vrot.lane.b32.xlu0 %v890, 96
      %v1134 = vpop.permute.xlu0 %1133
      %1135 = vrot.lane.b32.xlu0 %v891, 96
      %v1136 = vpop.permute.xlu0 %1135
      %1137 = vrot.lane.b32.xlu0 %v892, 96
      %v1138 = vpop.permute.xlu0 %1137
      %1139 = vrot.lane.b32.xlu0 %v893, 96
      %v1140 = vpop.permute.xlu0 %1139
      %1141 = vrot.lane.b32.xlu0 %v894, 96
      %v1142 = vpop.permute.xlu0 %1141
      %vm1151 = vcmask 97280
      %v1152 = vsel %vm1151, %v817, %v904
      %v1153 = vsel %vm1151, %v818, %v906
      %v1154 = vsel %vm1151, %v819, %v908
      %v1155 = vsel %vm1151, %v820, %v910
      %v1156 = vsel %vm1151, %v821, %v912
      %v1157 = vsel %vm1151, %v822, %v914
      %v1158 = vsel %vm1151, %v823, %v916
      %v1159 = vsel %vm1151, %v824, %v918
      %vm1160 = vcmask 195584
      %v1161 = vsel %vm1160, %v1152, %v936
      %v1162 = vsel %vm1160, %v1153, %v938
      %v1163 = vsel %vm1160, %v1154, %v940
      %v1164 = vsel %vm1160, %v1155, %v942
      %v1165 = vsel %vm1160, %v1156, %v944
      %v1166 = vsel %vm1160, %v1157, %v946
      %v1167 = vsel %vm1160, %v1158, %v948
      %v1168 = vsel %vm1160, %v1159, %v950
      %vm1169 = vcmask 293888
      %v1170 = vsel %vm1169, %v1161, %v968
      %v1171 = vsel %vm1169, %v1162, %v970
      %v1172 = vsel %vm1169, %v1163, %v972
      %v1173 = vsel %vm1169, %v1164, %v974
      %v1174 = vsel %vm1169, %v1165, %v976
      %v1175 = vsel %vm1169, %v1166, %v978
      %v1176 = vsel %vm1169, %v1167, %v980
      %v1177 = vsel %vm1169, %v1168, %v982
      %vm1178 = vcmask 392192
      %v1179 = vsel %vm1178, %v1170, %v1000
      %v1180 = vsel %vm1178, %v1171, %v1002
      %v1181 = vsel %vm1178, %v1172, %v1004
      %v1182 = vsel %vm1178, %v1173, %v1006
      %v1183 = vsel %vm1178, %v1174, %v1008
      %v1184 = vsel %vm1178, %v1175, %v1010
      %v1185 = vsel %vm1178, %v1176, %v1012
      %v1186 = vsel %vm1178, %v1177, %v1014
      %vm1187 = vcmask 490496
      %v1188 = vsel %vm1187, %v1179, %v1032
      %v1189 = vsel %vm1187, %v1180, %v1034
      %v1190 = vsel %vm1187, %v1181, %v1036
      %v1191 = vsel %vm1187, %v1182, %v1038
      %v1192 = vsel %vm1187, %v1183, %v1040
      %v1193 = vsel %vm1187, %v1184, %v1042
      %v1194 = vsel %vm1187, %v1185, %v1044
      %v1195 = vsel %vm1187, %v1186, %v1046
      %vm1196 = vcmask 588800
      %v1197 = vsel %vm1196, %v1188, %v1064
      %v1198 = vsel %vm1196, %v1189, %v1066
      %v1199 = vsel %vm1196, %v1190, %v1068
      %v1200 = vsel %vm1196, %v1191, %v1070
      %v1201 = vsel %vm1196, %v1192, %v1072
      %v1202 = vsel %vm1196, %v1193, %v1074
      %v1203 = vsel %vm1196, %v1194, %v1076
      %v1204 = vsel %vm1196, %v1195, %v1078
      %vm1205 = vcmask 687104
      %v1206 = vsel %vm1205, %v1197, %v1096
      %v1207 = vsel %vm1205, %v1198, %v1098
      %v1208 = vsel %vm1205, %v1199, %v1100
      %v1209 = vsel %vm1205, %v1200, %v1102
      %v1210 = vsel %vm1205, %v1201, %v1104
      %v1211 = vsel %vm1205, %v1202, %v1106
      %v1212 = vsel %vm1205, %v1203, %v1108
      %v1213 = vsel %vm1205, %v1204, %v1110
      %vm1214 = vcmask 785408
      %v1215 = vsel %vm1214, %v1206, %v1128
      %v1216 = vsel %vm1214, %v1207, %v1130
      %v1217 = vsel %vm1214, %v1208, %v1132
      %v1218 = vsel %vm1214, %v1209, %v1134
      %v1219 = vsel %vm1214, %v1210, %v1136
      %v1220 = vsel %vm1214, %v1211, %v1138
      %v1221 = vsel %vm1214, %v1212, %v1140
      %v1222 = vsel %vm1214, %v1213, %v1142
      %v1223 = vld [vmem:[%s3] sm:$0xff]
      %v1224 = vld [vmem:[%s3 + $0x8] sm:$0xff]
      %v1225 = vld [vmem:[%s3 + $0x10] sm:$0xff]
      %v1226 = vld [vmem:[%s3 + $0x18] sm:$0xff]
      %v1227 = vld [vmem:[%s3 + $0x20] sm:$0xff]
      %v1228 = vld [vmem:[%s3 + $0x28] sm:$0xff]
      %v1229 = vld [vmem:[%s3 + $0x30] sm:$0xff]
      %v1230 = vld [vmem:[%s3 + $0x38] sm:$0xff]
      %v1231 = vld [vmem:[%s3 + $0x40] sm:$0xff]
      %v1232 = vld [vmem:[%s3 + $0x48] sm:$0xff]
      %v1233 = vld [vmem:[%s3 + $0x50] sm:$0xff]
      %v1234 = vld [vmem:[%s3 + $0x58] sm:$0xff]
      %v1235 = vld [vmem:[%s3 + $0x60] sm:$0xff]
      %v1236 = vld [vmem:[%s3 + $0x68] sm:$0xf]
      %v1237 = vld [vmem:[%s6] sm:$0x1]
      %v1239 = vlaneseq
      %v1240 = vshrl.u32 %v1239, 7
      %v1241 = vsub.s32 0, %v1240
      %v1242 = vrot.slane %v1237, %v1241
      %vm1244 = vcmask 883712
      %v1246 = vsel %vm1244, %v1215, 0
      %v1249 = vsel %vm1244, %v1216, 0
      %v1252 = vsel %vm1244, %v1217, 0
      %v1255 = vsel %vm1244, %v1218, 0
      %v1258 = vsel %vm1244, %v1219, 0
      %v1261 = vsel %vm1244, %v1220, 0
      %v1264 = vsel %vm1244, %v1221, 0
      %v1267 = vsel %vm1244, %v1222, 0
      %vm1269 = vcmask 1043456
      %v1271 = vsel %vm1269, %v1236, 0
      %1273 = vmatprep.subr.mxu0 0.0
      %1274 = vmatpush1.msra.mxu0 %v1223
      %1275 = vmatprep.subr.mxu0 0.0
      %1276 = vmatpush1.msra.mxu0 %v1224
      %1277 = vmatprep.subr.mxu0 0.0
      %1278 = vmatpush1.msra.mxu0 %v1225
      %1279 = vmatprep.subr.mxu0 0.0
      %1280 = vmatpush1.msra.mxu0 %v1226
      %1281 = vmatprep.subr.mxu0 0.0
      %1282 = vmatpush1.msra.mxu0 %v1227
      %1283 = vmatprep.subr.mxu0 0.0
      %1284 = vmatpush1.msra.mxu0 %v1228
      %1285 = vmatprep.subr.mxu0 0.0
      %1286 = vmatpush1.msra.mxu0 %v1229
      %1287 = vmatprep.subr.mxu0 0.0
      %1288 = vmatpush1.msra.mxu0 %v1230
      %1289 = vmatprep.subr.mxu0 0.0
      %1290 = vmatpush1.msra.mxu0 %v1231
      %1291 = vmatprep.subr.mxu0 0.0
      %1292 = vmatpush1.msra.mxu0 %v1232
      %1293 = vmatprep.subr.mxu0 0.0
      %1294 = vmatpush1.msra.mxu0 %v1233
      %1295 = vmatprep.subr.mxu0 0.0
      %1296 = vmatpush1.msra.mxu0 %v1234
      %1297 = vmatprep.subr.mxu0 0.0
      %1298 = vmatpush1.msra.mxu0 %v1235
      %1299 = vmatprep.subr.mxu0 0.0
      %1300 = vmatpush1.msra.mxu0 %v1271
      %1301 = vmatprep.subr.mxu0 0.0
      %1302 = vmatpush1.msra.mxu0 0.0
      %1303 = vmatprep.subr.mxu0 0.0
      %1304 = vmatpush1.msra.mxu0 0.0
      %1305 = vmatprep.subr.mxu0 0.0
      %1306 = vmatpush1.msra.mxu0 0.0
      %1307 = vmatprep.subr.mxu0 0.0
      %1308 = vmatpush1.msra.mxu0 0.0
      %1309 = vmatprep.subr.mxu0 0.0
      %1310 = vmatpush1.msra.mxu0 0.0
      %1311 = vmatprep.subr.mxu0 0.0
      %1312 = vmatpush1.msra.mxu0 0.0
      %1313 = vmatprep.subr.mxu0 0.0
      %1314 = vmatpush1.msra.mxu0 0.0
      %1315 = vmatprep.subr.mxu0 0.0
      %1316 = vmatpush1.msra.mxu0 0.0
      %1317 = vmatprep.subr.mxu0 0.0
      %1318 = vmatpush1.msra.mxu0 0.0
      %1319 = vmatprep.subr.mxu0 0.0
      %1320 = vmatpush1.msra.mxu0 0.0
      %1321 = vmatprep.subr.mxu0 0.0
      %1322 = vmatpush1.msra.mxu0 0.0
      %1323 = vmatprep.subr.mxu0 0.0
      %1324 = vmatpush1.msra.mxu0 0.0
      %1325 = vmatprep.subr.mxu0 0.0
      %1326 = vmatpush1.msra.mxu0 0.0
      %1327 = vmatprep.subr.mxu0 0.0
      %1328 = vmatpush1.msra.mxu0 0.0
      %1329 = vmatprep.subr.mxu0 0.0
      %1330 = vmatpush1.msra.mxu0 0.0
      %1331 = vmatprep.subr.mxu0 0.0
      %1332 = vmatpush1.msra.mxu0 0.0
      %1333 = vmatprep.subr.mxu0 0.0
      %1334 = vmatpush1.msra.mxu0 0.0
      %1335 = vmatprep.subr.mxu0 0.0
      %1336 = vmatpush1.msra.mxu0 0.0
      %1337 = vmatprep.mubr.f32.mxu0 0.0
      %1338 = vmatmul.mubr.f32.gmra.mrb[0].mxu0 %v1246
      %v1339 = vpop.f32.mrb[0].mxu0
      %v1340 = vadd.f32 %v1242, %v1339
      %v1341 = vpop.f32.mrb[0].mxu0
      %1342 = vmatprep.mubr.f32.mxu0 0.0
      %1343 = vmatmul.mubr.f32.gmra.mrb[0].mxu0 %v1249
      %v1344 = vpop.f32.mrb[0].mxu0
      %v1345 = vadd.f32 %v1242, %v1344
      %v1346 = vpop.f32.mrb[0].mxu0
      %1347 = vmatprep.mubr.f32.mxu0 0.0
      %1348 = vmatmul.mubr.f32.gmra.mrb[0].mxu0 %v1252
      %v1349 = vpop.f32.mrb[0].mxu0
      %v1350 = vadd.f32 %v1242, %v1349
      %v1351 = vpop.f32.mrb[0].mxu0
      %1352 = vmatprep.mubr.f32.mxu0 0.0
      %1353 = vmatmul.mubr.f32.gmra.mrb[0].mxu0 %v1255
      %v1354 = vpop.f32.mrb[0].mxu0
      %v1355 = vadd.f32 %v1242, %v1354
      %v1356 = vpop.f32.mrb[0].mxu0
      %1357 = vmatprep.mubr.f32.mxu0 0.0
      %1358 = vmatmul.mubr.f32.gmra.mrb[0].mxu0 %v1258
      %v1359 = vpop.f32.mrb[0].mxu0
      %v1360 = vadd.f32 %v1242, %v1359
      %v1361 = vpop.f32.mrb[0].mxu0
      %1362 = vmatprep.mubr.f32.mxu0 0.0
      %1363 = vmatmul.mubr.f32.gmra.mrb[0].mxu0 %v1261
      %v1364 = vpop.f32.mrb[0].mxu0
      %v1365 = vadd.f32 %v1242, %v1364
      %v1366 = vpop.f32.mrb[0].mxu0
      %1367 = vmatprep.mubr.f32.mxu0 0.0
      %1368 = vmatmul.mubr.f32.gmra.mrb[0].mxu0 %v1264
      %v1369 = vpop.f32.mrb[0].mxu0
      %v1370 = vadd.f32 %v1242, %v1369
      %v1371 = vpop.f32.mrb[0].mxu0
      %1372 = vmatprep.mubr.f32.mxu0 0.0
      %1373 = vmatmul.mubr.f32.gmra.mrb[0].mxu0 %v1267
      %v1374 = vpop.f32.mrb[0].mxu0
      %v1375 = vadd.f32 %v1242, %v1374
      %v1376 = vpop.f32.mrb[0].mxu0
      %1377 = vdwg.mxu0
      %v1378 = vld [vmem:[%s560] sm:$0xff]
      %v1379 = vld [vmem:[%s560 + $0x8] sm:$0xff]
      %v1380 = vld [vmem:[%s560 + $0x10] sm:$0xff]
      %v1381 = vld [vmem:[%s560 + $0x18] sm:$0xff]
      %v1382 = vld [vmem:[%s560 + $0x20] sm:$0xff]
      %v1383 = vld [vmem:[%s560 + $0x28] sm:$0xff]
      %v1384 = vld [vmem:[%s560 + $0x30] sm:$0xff]
      %v1385 = vld [vmem:[%s560 + $0x38] sm:$0xff]
      %v1386 = vadd.f32 %v1378, %v1340
      %v1387 = vadd.f32 %v1379, %v1345
      %v1388 = vadd.f32 %v1380, %v1350
      %v1389 = vadd.f32 %v1381, %v1355
      %v1390 = vadd.f32 %v1382, %v1360
      %v1391 = vadd.f32 %v1383, %v1365
      %v1392 = vadd.f32 %v1384, %v1370
      %v1393 = vadd.f32 %v1385, %v1375
      %vm1394 = vcmask 261120
      %1395 = vst.msk [vmem:[%s574] sm:$0xff] %vm1394, %v1386
      %1396 = vst.msk [vmem:[%s574 + $0x8] sm:$0xff] %vm1394, %v1387
      %1397 = vst.msk [vmem:[%s574 + $0x10] sm:$0xff] %vm1394, %v1388
      %1398 = vst.msk [vmem:[%s574 + $0x18] sm:$0xff] %vm1394, %v1389
      %1399 = vst.msk [vmem:[%s574 + $0x20] sm:$0xff] %vm1394, %v1390
      %1400 = vst.msk [vmem:[%s574 + $0x28] sm:$0xff] %vm1394, %v1391
      %1401 = vst.msk [vmem:[%s574 + $0x30] sm:$0xff] %vm1394, %v1392
      %1402 = vst.msk [vmem:[%s574 + $0x38] sm:$0xff] %vm1394, %v1393
      %s1403 = smul.u32 8, %s26
      %p1404 = scmp.lt.s32.totalorder %s24, 1
      %s1405 = scalar_select %p1404, %s24, 1
      %p1406 = scmp.lt.s32.totalorder %s25, 3
      %s1407 = scalar_select %p1406, %s25, 3
      %p1408 = scmp.lt.s32.totalorder %s1403, 7
      %s1409 = scalar_select %p1408, %s1403, 7
      %s1410 = smul.addr %s1407, 8
      %s1411 = sadd.s32 %s1409, %s1410
      %s1412 = smul.addr %s1405, 32
      %s1413 = sadd.s32 %s1411, %s1412
      %s1414 = smul.addr %s1413, 8
      %s1415 = scalar_lea.vmem %s8, %s1414
      // Predicated region
      $region57: #{hourglass3d_up.1} parent=51 // pred_check
        %p1416 = pneg %p286
      $region58: #{hourglass3d_up.1} parent=51 // pred_check_branch
        %1418 = sbr.rel (%p1416) target = $region60
      $region59: #{hourglass3d_up.1} parent=51 // pred_region
        %s1419 = smul.u32 8, %s26
      $region60: #{hourglass3d_up.1} parent=51 // pred_fallthru
        _
    $region52: #{hourglass3d_up.1} parent=5 // pred_fallthru
      _
    %p1420 = scmp.le.s32.totalorder 2, %s14
    // Predicated region
    $region61: #{hourglass3d_up.1} parent=5 // pred_check
      %p1421 = pneg %p1420
    $region62: #{hourglass3d_up.1} parent=5 // pred_check_branch
      %1423 = sbr.rel (%p1421) target = $region64
    $region63: #{hourglass3d_up.1} parent=5 // pred_region
      %s1424 = ssub.s32 %s14, 2
      // Predicated region
      $region65: #{hourglass3d_up.1} parent=63 // pred_check
        %p1425 = pneg %p292
      $region66: #{hourglass3d_up.1} parent=63 // pred_check_branch
        %1427 = sbr.rel (%p1425) target = $region68
      $region67: #{hourglass3d_up.1} parent=63 // pred_region
        %s1428 = smul.u32 8, %s29
        %p1429 = scmp.lt.s32.totalorder %s27, 1
        %s1430 = scalar_select %p1429, %s27, 1
        %p1431 = scmp.lt.s32.totalorder %s28, 3
        %s1432 = scalar_select %p1431, %s28, 3
        %p1433 = scmp.lt.s32.totalorder %s1428, 7
        %s1434 = scalar_select %p1433, %s1428, 7
        %s1435 = smul.addr %s1432, 8
        %s1436 = sadd.s32 %s1434, %s1435
        %s1437 = smul.addr %s1430, 32
        %s1438 = sadd.s32 %s1436, %s1437
        %s1439 = smul.addr %s1438, 8
        %s1440 = scalar_lea.vmem %s8, %s1439
      $region68: #{hourglass3d_up.1} parent=63 // pred_fallthru
        _
    $region64: #{hourglass3d_up.1} parent=5 // pred_fallthru
      _
  $region6: #{hourglass3d_up.1} parent=0 // loop_footer
    %s18 = sadd.s32 1, %s14
  $region7: #{hourglass3d_up.1} parent=0 // loop_footer_branch
    %13 = sbr.rel target = $region3
  $region8: #{hourglass3d_up.1} parent=0 // loop_exit
    _

</llo_original>
